<compile_context>
chip_gen: v5e
topology: v5e:2x2
jax: 0.10.0
libtpu: 0.0.40
codegen_flags: <defaults>
</compile_context>

<pallas_src>
import functools
import numpy as np

import jax
import jax.numpy as jnp
from jax import lax
from jax.experimental import pallas as pl
from jax.experimental.pallas import tpu as pltpu

PAD = 0            # dataset.PAD
PAD_POSITION = 0   # dataset.PAD_POSITION


# ----------------------------------------------------------------------------
# Sinusoid position table (identical math to the torch helper).
# ----------------------------------------------------------------------------
def get_sinusoid_embedding_position_matrix(max_seq_len, embedding_dim, padding_idx=None):
    pos = np.arange(max_seq_len, dtype=np.float64)[:, None]
    j = np.arange(embedding_dim, dtype=np.float64)[None, :]
    table = pos / np.power(10000.0, 2.0 * (np.floor(j / 2.0)) / embedding_dim)
    table[:, 0::2] = np.sin(table[:, 0::2])
    table[:, 1::2] = np.cos(table[:, 1::2])
    if padding_idx is not None:
        table[padding_idx] = 0.0
    return jnp.asarray(table, dtype=jnp.float32)


# ----------------------------------------------------------------------------
# Pallas kernel: the full L-layer encoder stack for one batch element.
# grid = (B, L); the activation persists in VMEM scratch across the layer axis.
# ----------------------------------------------------------------------------
def encoder_stack_kernel(kpm_ref, npm_ref, x_ref,
                         wq_ref, bq_ref, wk_ref, bk_ref, wv_ref, bv_ref,
                         wo_ref, bo_ref, g1_ref, be1_ref,
                         w1_ref, b1_ref, w2_ref, b2_ref, g2_ref, be2_ref,
                         out_ref, act_ref,
                         *, num_head, temperature, eps):
    layer = pl.program_id(1)

    @pl.when(layer == 0)
    def _():                                   # load this sequence's embeddings once
        act_ref[...] = x_ref[0]

    x = act_ref[...]                           # [S, E] f32 activation (layer input)
    key_pad = kpm_ref[...]                     # [1, 1, S]  1.0 where key position is PAD
    npm = npm_ref[0]                           # [S, 1]     0.0 at pad query positions

    H = num_head
    S, E = x.shape

    # ---- multi-head self-attention (head-batched, bf16 MXU, f32 accum) ----------
    x_bf = x.astype(jnp.bfloat16)
    xb = jnp.broadcast_to(x_bf[None], (H, S, E))                       # [H, S, E]

    q = jnp.einsum('hse,hed->hsd', xb, wq_ref[0],
                   preferred_element_type=jnp.float32) + bq_ref[0]     # [H, S, Dk]
    k = jnp.einsum('hse,hed->hsd', xb, wk_ref[0],
                   preferred_element_type=jnp.float32) + bk_ref[0]     # [H, S, Dk]
    v = jnp.einsum('hse,hed->hsd', xb, wv_ref[0],
                   preferred_element_type=jnp.float32) + bv_ref[0]     # [H, S, Dv]

    s = jnp.einsum('hqd,hkd->hqk', q.astype(jnp.bfloat16), k.astype(jnp.bfloat16),
                   preferred_element_type=jnp.float32) * (1.0 / temperature)
    # masked_fill(mask, -inf): finite -1e30 so fully-padded rows stay NaN-free.
    s = jnp.where(key_pad > 0.5, jnp.float32(-1e30), s)                # [H, S, S]
    s = s - jnp.max(s, axis=-1, keepdims=True)                         # softmax(dim=-1)
    p = jnp.exp(s)
    p = p * pl.reciprocal(jnp.sum(p, axis=-1, keepdims=True), approx=True)

    o = jnp.einsum('hqk,hkd->hqd', p.astype(jnp.bfloat16), v.astype(jnp.bfloat16),
                   preferred_element_type=jnp.float32)                 # [H, S, Dv]
    o = jnp.einsum('hsd,hde->hse', o.astype(jnp.bfloat16), wo_ref[0],
                   preferred_element_type=jnp.float32)                 # [H, S, E]
    attn = jnp.sum(o, axis=0) + bo_ref[0]                              # [S, E]  (fc)

    a = attn + x                                                       # residual
    mu = jnp.mean(a, axis=-1, keepdims=True)                           # LayerNorm 1
    var = jnp.mean((a - mu) ** 2, axis=-1, keepdims=True)
    a = (a - mu) * lax.rsqrt(var + eps) * g1_ref[0] + be1_ref[0]
    a = a * npm                                                        # *= non_pad_mask

    # ---- feed forward ------------------------------------------------------------
    h1 = jnp.dot(a.astype(jnp.bfloat16), w1_ref[0],
                 preferred_element_type=jnp.float32) + b1_ref[0]
    h1 = jnp.maximum(h1, 0.0)                                          # relu
    f = jnp.dot(h1.astype(jnp.bfloat16), w2_ref[0],
                preferred_element_type=jnp.float32) + b2_ref[0]
    f = f + a                                                          # residual
    mu2 = jnp.mean(f, axis=-1, keepdims=True)                          # LayerNorm 2
    var2 = jnp.mean((f - mu2) ** 2, axis=-1, keepdims=True)
    f = (f - mu2) * lax.rsqrt(var2 + eps) * g2_ref[0] + be2_ref[0]
    f = f * npm                                                        # *= non_pad_mask

    act_ref[...] = f            # feeds the next layer (scratch persists across grid)
    out_ref[0] = f              # output block is resident across the layer axis


def encoder_stack_pallas(x, kpm, npm, stacked, *, num_head, qk_dim, num_layers):
    """x: [B,S,E] f32; kpm: [B,1,S] f32; npm: [B,S,1] f32; stacked: dict of [L,...]."""
    B, S, E = x.shape
    temperature = float(np.power(qk_dim, 0.5))
    kern = functools.partial(encoder_stack_kernel, num_head=num_head,
                             temperature=temperature, eps=1e-5)

    names = ["wq", "bq", "wk", "bk", "wv", "bv", "wo", "bo",
             "g1", "be1", "w1", "b1", "w2", "b2", "g2", "be2"]
    weights = [stacked[n] for n in names]

    def wspec(arr):                      # stream layer `l`'s slice of a stacked weight
        nd = arr.ndim
        blk = (1,) + arr.shape[1:]
        return pl.BlockSpec(blk, lambda b, l, _nd=nd: (l,) + (0,) * (_nd - 1))

    in_specs = [
        pl.BlockSpec((1, 1, S), lambda b, l: (b, 0, 0)),   # key-pad vector
        pl.BlockSpec((1, S, 1), lambda b, l: (b, 0, 0)),   # non-pad mask
        pl.BlockSpec((1, S, E), lambda b, l: (b, 0, 0)),   # input embeddings
    ] + [wspec(w) for w in weights]

    return pl.pallas_call(
        kern,
        out_shape=jax.ShapeDtypeStruct((B, S, E), jnp.float32),
        grid=(B, num_layers),
        in_specs=in_specs,
        out_specs=pl.BlockSpec((1, S, E), lambda b, l: (b, 0, 0)),
        scratch_shapes=[pltpu.VMEM((S, E), jnp.float32)],
        compiler_params=pltpu.CompilerParams(
            dimension_semantics=("parallel", "arbitrary"),
            vmem_limit_bytes=32 * 1024 * 1024),
    )(kpm, npm, x, *weights)


# ----------------------------------------------------------------------------
# Deterministic parameter init (shapes per EncoderLayer's __init__), f32 master.
# ----------------------------------------------------------------------------
def init_layer_params(key, E, H, Dk, Dv, F):
    ks = jax.random.split(key, 9)
    qk_std = np.sqrt(2.0 / (E + Dk))
    v_std = np.sqrt(2.0 / (E + Dv))
    fc_std = np.sqrt(2.0 / (H * Dv + E))   # xavier_normal_
    nrm = lambda k, sh, s: jax.random.normal(k, sh, jnp.float32) * s
    return dict(
        wq=nrm(ks[0], (E, H * Dk), qk_std), bq=jnp.zeros((1, H * Dk), jnp.float32),
        wk=nrm(ks[1], (E, H * Dk), qk_std), bk=jnp.zeros((1, H * Dk), jnp.float32),
        wv=nrm(ks[2], (E, H * Dv), v_std),  bv=jnp.zeros((1, H * Dv), jnp.float32),
        wo=nrm(ks[3], (H * Dv, E), fc_std), bo=nrm(ks[4], (1, E), 0.02),
        g1=jnp.ones((1, E), jnp.float32),   be1=jnp.zeros((1, E), jnp.float32),
        w1=nrm(ks[5], (E, F), np.sqrt(1.0 / E)), b1=nrm(ks[6], (1, F), 0.02),
        w2=nrm(ks[7], (F, E), np.sqrt(1.0 / F)), b2=nrm(ks[8], (1, E), 0.02),
        g2=jnp.ones((1, E), jnp.float32),   be2=jnp.zeros((1, E), jnp.float32),
    )


def stack_layer_params(layer_params, H, Dk, Dv):
    """Stack per-layer params to [L, ...]; matmul weights to bf16 in head-batched
    layout ([H,E,Dk] / [H,Dv,E]); biases / LayerNorm params stay f32."""
    E = layer_params[0]["wq"].shape[0]
    bf = jnp.bfloat16
    stk = lambda fn, name: jnp.stack([fn(p[name]) for p in layer_params], axis=0)
    return dict(
        wq=stk(lambda w: w.reshape(E, H, Dk).transpose(1, 0, 2).astype(bf), "wq"),
        bq=stk(lambda b: b.reshape(H, 1, Dk), "bq"),
        wk=stk(lambda w: w.reshape(E, H, Dk).transpose(1, 0, 2).astype(bf), "wk"),
        bk=stk(lambda b: b.reshape(H, 1, Dk), "bk"),
        wv=stk(lambda w: w.reshape(E, H, Dv).transpose(1, 0, 2).astype(bf), "wv"),
        bv=stk(lambda b: b.reshape(H, 1, Dv), "bv"),
        wo=stk(lambda w: w.reshape(H, Dv, E).astype(bf), "wo"),
        bo=stk(lambda b: b, "bo"),
        g1=stk(lambda g: g, "g1"), be1=stk(lambda b: b, "be1"),
        w1=stk(lambda w: w.astype(bf), "w1"), b1=stk(lambda b: b, "b1"),
        w2=stk(lambda w: w.astype(bf), "w2"), b2=stk(lambda b: b, "b2"),
        g2=stk(lambda g: g, "g2"), be2=stk(lambda b: b, "be2"),
    )


# ----------------------------------------------------------------------------
# Pure-JAX f32 reference of one EncoderLayer (for correctness check).
# ----------------------------------------------------------------------------
def encoder_layer_ref(x, kpm_vec, npm, p, H, Dk, Dv):
    B, S, E = x.shape

    def ln(y, g, b, eps=1e-5):
        mu = y.mean(-1, keepdims=True)
        var = ((y - mu) ** 2).mean(-1, keepdims=True)
        return (y - mu) / jnp.sqrt(var + eps) * g + b

    q = x @ p["wq"] + p["bq"][0]
    k = x @ p["wk"] + p["bk"][0]
    v = x @ p["wv"] + p["bv"][0]
    split = lambda t, d: t.reshape(B, S, H, d).transpose(0, 2, 1, 3)
    qh, kh, vh = split(q, Dk), split(k, Dk), split(v, Dv)
    s = jnp.einsum("bhqd,bhkd->bhqk", qh, kh) / np.sqrt(Dk)
    s = jnp.where(kpm_vec[:, None] > 0.5, -jnp.inf, s)   # [B,1,1,S] vs [B,H,S,S]
    a = jax.nn.softmax(s, axis=-1)
    o = jnp.einsum("bhqk,bhkd->bhqd", a, vh).transpose(0, 2, 1, 3).reshape(B, S, H * Dv)
    o = o @ p["wo"] + p["bo"][0]
    o = ln(o + x, p["g1"][0], p["be1"][0]) * npm
    f = jnp.maximum(o @ p["w1"] + p["b1"][0], 0.0) @ p["w2"] + p["b2"][0]
    return ln(f + o, p["g2"][0], p["be2"][0]) * npm


# ----------------------------------------------------------------------------
if __name__ == "__main__":
    B, S = 2, 8
    E, H, Dk, Dv, F = 32, 4, 8, 8, 64
    L = 2
    vocab, max_len = 50, 16

    key = jax.random.PRNGKey(0)
    k_tok, k_emb, k_layers = jax.random.split(key, 3)

    # token ids (0 = PAD); pad the tails of each sequence
    source_seq = jax.random.randint(k_tok, (B, S), 1, vocab)
    source_seq = source_seq.at[0, 6:].set(PAD)
    source_seq = source_seq.at[1, 7:].set(PAD)
    # positions: 1..len, 0 (PAD_POSITION) at pad slots
    source_position = jnp.arange(1, S + 1, dtype=jnp.int32)[None, :] * (source_seq != PAD)

    # embeddings (word embedding padding_idx=PAD -> zero row)
    word_emb = jax.random.normal(k_emb, (vocab, E), jnp.float32) * 0.1
    word_emb = word_emb.at[PAD].set(0.0)
    pos_emb = get_sinusoid_embedding_position_matrix(max_len, E, padding_idx=PAD_POSITION)

    layer_keys = jax.random.split(k_layers, L)
    layer_params = [init_layer_params(layer_keys[i], E, H, Dk, Dv, F) for i in range(L)]
    stacked = stack_layer_params(layer_params, H, Dk, Dv)

    # masks (glue) -- key-pad kept rank-1 ([B,1,S]); broadcast happens in-kernel
    kpm_vec = (source_seq == PAD).astype(jnp.float32)[:, None, :]   # [B, 1, S]
    npm = (source_seq != PAD).astype(jnp.float32)[:, :, None]       # [B, S, 1]

    # word + position embedding lookup (glue)
    x0 = word_emb[source_seq] + pos_emb[source_position]

    # --- Pallas encoder stack (single fused pallas_call over all layers) ---
    out = encoder_stack_pallas(x0, kpm_vec, npm, stacked,
                               num_head=H, qk_dim=Dk, num_layers=L)
    out = jax.block_until_ready(out)

    # --- f32 reference check (kernel uses bf16 MXU operands -> loose tolerance) ---
    ref = x0
    for p in layer_params:
        ref = encoder_layer_ref(ref, kpm_vec, npm, p, H, Dk, Dv)
    ref = jax.block_until_ready(ref)

    assert out.shape == (B, S, E)
    assert bool(jnp.all(jnp.isfinite(out)))
    assert np.allclose(np.asarray(out), np.asarray(ref), atol=5e-2, rtol=5e-2)
    print("KERNEL_OK")
</pallas_src>

<mosaic_0001>
module attributes {stable_mosaic.version = 11 : i64} {
  func.func @encoder_stack_kernel(%arg0: i32, %arg1: i32, %arg2: memref<1x1x8xf32, #tpu.memory_space<vmem>>, %arg3: memref<1x8x1xf32, #tpu.memory_space<vmem>>, %arg4: memref<1x8x32xf32, #tpu.memory_space<vmem>>, %arg5: memref<1x4x32x8xbf16, #tpu.memory_space<vmem>>, %arg6: memref<1x4x1x8xf32, #tpu.memory_space<vmem>>, %arg7: memref<1x4x32x8xbf16, #tpu.memory_space<vmem>>, %arg8: memref<1x4x1x8xf32, #tpu.memory_space<vmem>>, %arg9: memref<1x4x32x8xbf16, #tpu.memory_space<vmem>>, %arg10: memref<1x4x1x8xf32, #tpu.memory_space<vmem>>, %arg11: memref<1x4x8x32xbf16, #tpu.memory_space<vmem>>, %arg12: memref<1x1x32xf32, #tpu.memory_space<vmem>>, %arg13: memref<1x1x32xf32, #tpu.memory_space<vmem>>, %arg14: memref<1x1x32xf32, #tpu.memory_space<vmem>>, %arg15: memref<1x32x64xbf16, #tpu.memory_space<vmem>>, %arg16: memref<1x1x64xf32, #tpu.memory_space<vmem>>, %arg17: memref<1x64x32xbf16, #tpu.memory_space<vmem>>, %arg18: memref<1x1x32xf32, #tpu.memory_space<vmem>>, %arg19: memref<1x1x32xf32, #tpu.memory_space<vmem>>, %arg20: memref<1x1x32xf32, #tpu.memory_space<vmem>>, %arg21: memref<1x8x32xf32, #tpu.memory_space<vmem>>, %arg22: memref<8x32xf32, #tpu.memory_space<vmem>>) attributes {dimension_semantics = [#tpu.dimension_semantics<parallel>, #tpu.dimension_semantics<arbitrary>], iteration_bounds = array<i64: 2, 2>, scalar_prefetch = 0 : i64, scratch_operands = 1 : i64, tpu.core_type = #tpu.core_type<tc>, window_params = [{transform_indices = @transform_0, window_bounds = array<i64: 1, 1, 8>}, {transform_indices = @transform_1, window_bounds = array<i64: 1, 8, 1>}, {transform_indices = @transform_2, window_bounds = array<i64: 1, 8, 32>}, {transform_indices = @transform_3, window_bounds = array<i64: 1, 4, 32, 8>}, {transform_indices = @transform_4, window_bounds = array<i64: 1, 4, 1, 8>}, {transform_indices = @transform_5, window_bounds = array<i64: 1, 4, 32, 8>}, {transform_indices = @transform_6, window_bounds = array<i64: 1, 4, 1, 8>}, {transform_indices = @transform_7, window_bounds = array<i64: 1, 4, 32, 8>}, {transform_indices = @transform_8, window_bounds = array<i64: 1, 4, 1, 8>}, {transform_indices = @transform_9, window_bounds = array<i64: 1, 4, 8, 32>}, {transform_indices = @transform_10, window_bounds = array<i64: 1, 1, 32>}, {transform_indices = @transform_11, window_bounds = array<i64: 1, 1, 32>}, {transform_indices = @transform_12, window_bounds = array<i64: 1, 1, 32>}, {transform_indices = @transform_13, window_bounds = array<i64: 1, 32, 64>}, {transform_indices = @transform_14, window_bounds = array<i64: 1, 1, 64>}, {transform_indices = @transform_15, window_bounds = array<i64: 1, 64, 32>}, {transform_indices = @transform_16, window_bounds = array<i64: 1, 1, 32>}, {transform_indices = @transform_17, window_bounds = array<i64: 1, 1, 32>}, {transform_indices = @transform_18, window_bounds = array<i64: 1, 1, 32>}, {transform_indices = @transform_19, window_bounds = array<i64: 1, 8, 32>}]} {
    %c0_i32 = arith.constant 0 : i32
    %0 = arith.cmpi eq, %arg1, %c0_i32 : i32
    %1 = arith.extui %0 : i1 to i32
    %c0_i32_0 = arith.constant 0 : i32
    %2 = arith.cmpi ne, %1, %c0_i32_0 : i32
    scf.if %2 {
      %c0_92 = arith.constant 0 : index
      %c0_93 = arith.constant 0 : index
      %c0_94 = arith.constant 0 : index
      %145 = vector.load %arg4[%c0_92, %c0_93, %c0_94] : memref<1x8x32xf32, #tpu.memory_space<vmem>>, vector<1x8x32xf32>
      %146 = vector.shape_cast %145 : vector<1x8x32xf32> to vector<8x32xf32>
      %c0_95 = arith.constant 0 : index
      %c0_96 = arith.constant 0 : index
      %147 = vector.load %arg22[%c0_95, %c0_96] : memref<8x32xf32, #tpu.memory_space<vmem>>, vector<8x32xf32>
      tpu.vector_store %arg22[%c0_95, %c0_96], %146 {strides = array<i32>} : memref<8x32xf32, #tpu.memory_space<vmem>>, vector<8x32xf32>,
    } else {
    }
    %c0 = arith.constant 0 : index
    %c0_1 = arith.constant 0 : index
    %3 = vector.load %arg22[%c0, %c0_1] : memref<8x32xf32, #tpu.memory_space<vmem>>, vector<8x32xf32>
    %c0_2 = arith.constant 0 : index
    %c0_3 = arith.constant 0 : index
    %c0_4 = arith.constant 0 : index
    %4 = vector.load %arg2[%c0_2, %c0_3, %c0_4] : memref<1x1x8xf32, #tpu.memory_space<vmem>>, vector<1x1x8xf32>
    %c0_5 = arith.constant 0 : index
    %c0_6 = arith.constant 0 : index
    %c0_7 = arith.constant 0 : index
    %5 = vector.load %arg3[%c0_5, %c0_6, %c0_7] : memref<1x8x1xf32, #tpu.memory_space<vmem>>, vector<1x8x1xf32>
    %6 = vector.shape_cast %5 : vector<1x8x1xf32> to vector<8x1xf32>
    %7 = arith.truncf %3 : vector<8x32xf32> to vector<8x32xbf16>
    %8 = vector.shape_cast %7 : vector<8x32xbf16> to vector<1x8x32xbf16>
    %9 = vector.shape_cast %8 : vector<1x8x32xbf16> to vector<1x8x32xbf16>
    %10 = vector.broadcast %9 : vector<1x8x32xbf16> to vector<4x8x32xbf16>
    %c0_8 = arith.constant 0 : index
    %c0_9 = arith.constant 0 : index
    %c0_10 = arith.constant 0 : index
    %c0_11 = arith.constant 0 : index
    %11 = vector.load %arg5[%c0_8, %c0_9, %c0_10, %c0_11] : memref<1x4x32x8xbf16, #tpu.memory_space<vmem>>, vector<1x4x32x8xbf16>
    %12 = vector.shape_cast %11 : vector<1x4x32x8xbf16> to vector<4x32x8xbf16>
    "tpu.trace_start"() <{level = 10 : i32, message = "hse,hed->hsd"}> : () -> ()
    %cst = arith.constant dense<0.000000e+00> : vector<4x8x8xf32>
    %13 = tpu.matmul %10, %12, %cst {dimension_numbers = #tpu.dot_dimension_numbers<[2], [1], [1], [2], [0, 0, 0, 1, 1, 2], [0], [0]>} : vector<4x8x32xbf16>, vector<4x32x8xbf16>, vector<4x8x8xf32> -> vector<4x8x8xf32>
    "tpu.trace_stop"() : () -> ()
    %c0_12 = arith.constant 0 : index
    %c0_13 = arith.constant 0 : index
    %c0_14 = arith.constant 0 : index
    %c0_15 = arith.constant 0 : index
    %14 = vector.load %arg6[%c0_12, %c0_13, %c0_14, %c0_15] : memref<1x4x1x8xf32, #tpu.memory_space<vmem>>, vector<1x4x1x8xf32>
    %15 = vector.shape_cast %14 : vector<1x4x1x8xf32> to vector<4x1x8xf32>
    %16 = vector.broadcast %15 : vector<4x1x8xf32> to vector<4x8x8xf32>
    %17 = arith.addf %13, %16 : vector<4x8x8xf32>
    %c0_16 = arith.constant 0 : index
    %c0_17 = arith.constant 0 : index
    %c0_18 = arith.constant 0 : index
    %c0_19 = arith.constant 0 : index
    %18 = vector.load %arg7[%c0_16, %c0_17, %c0_18, %c0_19] : memref<1x4x32x8xbf16, #tpu.memory_space<vmem>>, vector<1x4x32x8xbf16>
    %19 = vector.shape_cast %18 : vector<1x4x32x8xbf16> to vector<4x32x8xbf16>
    "tpu.trace_start"() <{level = 10 : i32, message = "hse,hed->hsd"}> : () -> ()
    %cst_20 = arith.constant dense<0.000000e+00> : vector<4x8x8xf32>
    %20 = tpu.matmul %10, %19, %cst_20 {dimension_numbers = #tpu.dot_dimension_numbers<[2], [1], [1], [2], [0, 0, 0, 1, 1, 2], [0], [0]>} : vector<4x8x32xbf16>, vector<4x32x8xbf16>, vector<4x8x8xf32> -> vector<4x8x8xf32>
    "tpu.trace_stop"() : () -> ()
    %c0_21 = arith.constant 0 : index
    %c0_22 = arith.constant 0 : index
    %c0_23 = arith.constant 0 : index
    %c0_24 = arith.constant 0 : index
    %21 = vector.load %arg8[%c0_21, %c0_22, %c0_23, %c0_24] : memref<1x4x1x8xf32, #tpu.memory_space<vmem>>, vector<1x4x1x8xf32>
    %22 = vector.shape_cast %21 : vector<1x4x1x8xf32> to vector<4x1x8xf32>
    %23 = vector.broadcast %22 : vector<4x1x8xf32> to vector<4x8x8xf32>
    %24 = arith.addf %20, %23 : vector<4x8x8xf32>
    %c0_25 = arith.constant 0 : index
    %c0_26 = arith.constant 0 : index
    %c0_27 = arith.constant 0 : index
    %c0_28 = arith.constant 0 : index
    %25 = vector.load %arg9[%c0_25, %c0_26, %c0_27, %c0_28] : memref<1x4x32x8xbf16, #tpu.memory_space<vmem>>, vector<1x4x32x8xbf16>
    %26 = vector.shape_cast %25 : vector<1x4x32x8xbf16> to vector<4x32x8xbf16>
    "tpu.trace_start"() <{level = 10 : i32, message = "hse,hed->hsd"}> : () -> ()
    %cst_29 = arith.constant dense<0.000000e+00> : vector<4x8x8xf32>
    %27 = tpu.matmul %10, %26, %cst_29 {dimension_numbers = #tpu.dot_dimension_numbers<[2], [1], [1], [2], [0, 0, 0, 1, 1, 2], [0], [0]>} : vector<4x8x32xbf16>, vector<4x32x8xbf16>, vector<4x8x8xf32> -> vector<4x8x8xf32>
    "tpu.trace_stop"() : () -> ()
    %c0_30 = arith.constant 0 : index
    %c0_31 = arith.constant 0 : index
    %c0_32 = arith.constant 0 : index
    %c0_33 = arith.constant 0 : index
    %28 = vector.load %arg10[%c0_30, %c0_31, %c0_32, %c0_33] : memref<1x4x1x8xf32, #tpu.memory_space<vmem>>, vector<1x4x1x8xf32>
    %29 = vector.shape_cast %28 : vector<1x4x1x8xf32> to vector<4x1x8xf32>
    %30 = vector.broadcast %29 : vector<4x1x8xf32> to vector<4x8x8xf32>
    %31 = arith.addf %27, %30 : vector<4x8x8xf32>
    %32 = arith.truncf %17 : vector<4x8x8xf32> to vector<4x8x8xbf16>
    %33 = arith.truncf %24 : vector<4x8x8xf32> to vector<4x8x8xbf16>
    "tpu.trace_start"() <{level = 10 : i32, message = "hqd,hkd->hqk"}> : () -> ()
    %cst_34 = arith.constant dense<0.000000e+00> : vector<4x8x8xf32>
    %34 = tpu.matmul %32, %33, %cst_34 {dimension_numbers = #tpu.dot_dimension_numbers<[2], [2], [1], [1], [0, 0, 0, 1, 1, 1], [0], [0]>} : vector<4x8x8xbf16>, vector<4x8x8xbf16>, vector<4x8x8xf32> -> vector<4x8x8xf32>
    "tpu.trace_stop"() : () -> ()
    %cst_35 = arith.constant 0.353553385 : f32
    %35 = vector.broadcast %cst_35 : f32 to vector<4x8x8xf32>
    %36 = arith.mulf %34, %35 : vector<4x8x8xf32>
    %cst_36 = arith.constant 5.000000e-01 : f32
    %37 = vector.broadcast %cst_36 : f32 to vector<1x1x8xf32>
    %38 = arith.cmpf ogt, %4, %37 : vector<1x1x8xf32>
    %cst_37 = arith.constant -1.000000e+30 : f32
    %39 = vector.shape_cast %38 : vector<1x1x8xi1> to vector<1x1x8xi1>
    %40 = vector.broadcast %39 : vector<1x1x8xi1> to vector<4x8x8xi1>
    %41 = vector.broadcast %cst_37 : f32 to vector<4x8x8xf32>
    %42 = arith.select %40, %41, %36 : vector<4x8x8xi1>, vector<4x8x8xf32>
    %cst_38 = arith.constant dense<0xFF800000> : vector<4x8xf32>
    %43 = vector.multi_reduction <maximumf>, %42, %cst_38 [2] : vector<4x8x8xf32> to vector<4x8xf32>
    %44 = vector.shape_cast %43 : vector<4x8xf32> to vector<4x8x1xf32>
    %45 = vector.broadcast %44 : vector<4x8x1xf32> to vector<4x8x8xf32>
    %46 = arith.subf %42, %45 : vector<4x8x8xf32>
    %47 = math.exp %46 : vector<4x8x8xf32>
    %cst_39 = arith.constant dense<0.000000e+00> : vector<4x8xf32>
    %48 = vector.multi_reduction <add>, %47, %cst_39 [2] : vector<4x8x8xf32> to vector<4x8xf32>
    %49 = vector.shape_cast %48 : vector<4x8xf32> to vector<4x8x1xf32>
    %50 = tpu.reciprocal %49 {approx = true} : vector<4x8x1xf32> -> vector<4x8x1xf32>
    %51 = vector.broadcast %50 : vector<4x8x1xf32> to vector<4x8x8xf32>
    %52 = arith.mulf %47, %51 : vector<4x8x8xf32>
    %53 = arith.truncf %52 : vector<4x8x8xf32> to vector<4x8x8xbf16>
    %54 = arith.truncf %31 : vector<4x8x8xf32> to vector<4x8x8xbf16>
    "tpu.trace_start"() <{level = 10 : i32, message = "hqk,hkd->hqd"}> : () -> ()
    %cst_40 = arith.constant dense<0.000000e+00> : vector<4x8x8xf32>
    %55 = tpu.matmul %53, %54, %cst_40 {dimension_numbers = #tpu.dot_dimension_numbers<[2], [1], [1], [2], [0, 0, 0, 1, 1, 2], [0], [0]>} : vector<4x8x8xbf16>, vector<4x8x8xbf16>, vector<4x8x8xf32> -> vector<4x8x8xf32>
    "tpu.trace_stop"() : () -> ()
    %56 = arith.truncf %55 : vector<4x8x8xf32> to vector<4x8x8xbf16>
    %c0_41 = arith.constant 0 : index
    %c0_42 = arith.constant 0 : index
    %c0_43 = arith.constant 0 : index
    %c0_44 = arith.constant 0 : index
    %57 = vector.load %arg11[%c0_41, %c0_42, %c0_43, %c0_44] : memref<1x4x8x32xbf16, #tpu.memory_space<vmem>>, vector<1x4x8x32xbf16>
    %58 = vector.shape_cast %57 : vector<1x4x8x32xbf16> to vector<4x8x32xbf16>
    "tpu.trace_start"() <{level = 10 : i32, message = "hsd,hde->hse"}> : () -> ()
    %cst_45 = arith.constant dense<0.000000e+00> : vector<4x8x32xf32>
    %59 = tpu.matmul %56, %58, %cst_45 {dimension_numbers = #tpu.dot_dimension_numbers<[2], [1], [1], [2], [0, 0, 0, 1, 1, 2], [0], [0]>} : vector<4x8x8xbf16>, vector<4x8x32xbf16>, vector<4x8x32xf32> -> vector<4x8x32xf32>
    "tpu.trace_stop"() : () -> ()
    %cst_46 = arith.constant dense<0.000000e+00> : vector<8x32xf32>
    %60 = vector.multi_reduction <add>, %59, %cst_46 [0] : vector<4x8x32xf32> to vector<8x32xf32>
    %c0_47 = arith.constant 0 : index
    %c0_48 = arith.constant 0 : index
    %c0_49 = arith.constant 0 : index
    %61 = vector.load %arg12[%c0_47, %c0_48, %c0_49] : memref<1x1x32xf32, #tpu.memory_space<vmem>>, vector<1x1x32xf32>
    %62 = vector.shape_cast %61 : vector<1x1x32xf32> to vector<1x32xf32>
    %63 = vector.broadcast %62 : vector<1x32xf32> to vector<8x32xf32>
    %64 = arith.addf %60, %63 : vector<8x32xf32>
    %65 = arith.addf %64, %3 : vector<8x32xf32>
    %cst_50 = arith.constant dense<0.000000e+00> : vector<8xf32>
    %66 = vector.multi_reduction <add>, %65, %cst_50 [1] : vector<8x32xf32> to vector<8xf32>
    %67 = vector.shape_cast %66 : vector<8xf32> to vector<8x1xf32>
    %cst_51 = arith.constant 3.200000e+01 : f32
    %68 = vector.broadcast %cst_51 : f32 to vector<8x1xf32>
    %69 = arith.divf %67, %68 : vector<8x1xf32>
    %70 = vector.broadcast %69 : vector<8x1xf32> to vector<8x32xf32>
    %71 = arith.subf %65, %70 : vector<8x32xf32>
    %72 = arith.mulf %71, %71 : vector<8x32xf32>
    %cst_52 = arith.constant dense<0.000000e+00> : vector<8xf32>
    %73 = vector.multi_reduction <add>, %72, %cst_52 [1] : vector<8x32xf32> to vector<8xf32>
    %74 = vector.shape_cast %73 : vector<8xf32> to vector<8x1xf32>
    %cst_53 = arith.constant 3.200000e+01 : f32
    %75 = vector.broadcast %cst_53 : f32 to vector<8x1xf32>
    %76 = arith.divf %74, %75 : vector<8x1xf32>
    %77 = vector.broadcast %69 : vector<8x1xf32> to vector<8x32xf32>
    %78 = arith.subf %65, %77 : vector<8x32xf32>
    %cst_54 = arith.constant 9.99999974E-6 : f32
    %79 = vector.broadcast %cst_54 : f32 to vector<8x1xf32>
    %80 = arith.addf %76, %79 : vector<8x1xf32>
    %81 = math.rsqrt %80 : vector<8x1xf32>
    %82 = vector.broadcast %81 : vector<8x1xf32> to vector<8x32xf32>
    %83 = arith.mulf %78, %82 : vector<8x32xf32>
    %c0_55 = arith.constant 0 : index
    %c0_56 = arith.constant 0 : index
    %c0_57 = arith.constant 0 : index
    %84 = vector.load %arg13[%c0_55, %c0_56, %c0_57] : memref<1x1x32xf32, #tpu.memory_space<vmem>>, vector<1x1x32xf32>
    %85 = vector.shape_cast %84 : vector<1x1x32xf32> to vector<1x32xf32>
    %86 = vector.broadcast %85 : vector<1x32xf32> to vector<8x32xf32>
    %87 = arith.mulf %83, %86 : vector<8x32xf32>
    %c0_58 = arith.constant 0 : index
    %c0_59 = arith.constant 0 : index
    %c0_60 = arith.constant 0 : index
    %88 = vector.load %arg14[%c0_58, %c0_59, %c0_60] : memref<1x1x32xf32, #tpu.memory_space<vmem>>, vector<1x1x32xf32>
    %89 = vector.shape_cast %88 : vector<1x1x32xf32> to vector<1x32xf32>
    %90 = vector.broadcast %89 : vector<1x32xf32> to vector<8x32xf32>
    %91 = arith.addf %87, %90 : vector<8x32xf32>
    %92 = vector.broadcast %6 : vector<8x1xf32> to vector<8x32xf32>
    %93 = arith.mulf %91, %92 : vector<8x32xf32>
    %94 = arith.truncf %93 : vector<8x32xf32> to vector<8x32xbf16>
    %c0_61 = arith.constant 0 : index
    %c0_62 = arith.constant 0 : index
    %c0_63 = arith.constant 0 : index
    %95 = vector.load %arg15[%c0_61, %c0_62, %c0_63] : memref<1x32x64xbf16, #tpu.memory_space<vmem>>, vector<1x32x64xbf16>
    %96 = vector.shape_cast %95 : vector<1x32x64xbf16> to vector<32x64xbf16>
    %cst_64 = arith.constant dense<0.000000e+00> : vector<8x64xf32>
    %97 = tpu.matmul %94, %96, %cst_64 {dimension_numbers = #tpu.dot_dimension_numbers<[1], [0], [0], [1], [0, 0, 1, 1], [], []>} : vector<8x32xbf16>, vector<32x64xbf16>, vector<8x64xf32> -> vector<8x64xf32>
    %c0_65 = arith.constant 0 : index
    %c0_66 = arith.constant 0 : index
    %c0_67 = arith.constant 0 : index
    %98 = vector.load %arg16[%c0_65, %c0_66, %c0_67] : memref<1x1x64xf32, #tpu.memory_space<vmem>>, vector<1x1x64xf32>
    %99 = vector.shape_cast %98 : vector<1x1x64xf32> to vector<1x64xf32>
    %100 = vector.broadcast %99 : vector<1x64xf32> to vector<8x64xf32>
    %101 = arith.addf %97, %100 : vector<8x64xf32>
    %cst_68 = arith.constant 0.000000e+00 : f32
    %102 = vector.broadcast %cst_68 : f32 to vector<8x64xf32>
    %103 = arith.maximumf %101, %102 : vector<8x64xf32>
    %104 = arith.truncf %103 : vector<8x64xf32> to vector<8x64xbf16>
    %c0_69 = arith.constant 0 : index
    %c0_70 = arith.constant 0 : index
    %c0_71 = arith.constant 0 : index
    %105 = vector.load %arg17[%c0_69, %c0_70, %c0_71] : memref<1x64x32xbf16, #tpu.memory_space<vmem>>, vector<1x64x32xbf16>
    %106 = vector.shape_cast %105 : vector<1x64x32xbf16> to vector<64x32xbf16>
    %cst_72 = arith.constant dense<0.000000e+00> : vector<8x32xf32>
    %107 = tpu.matmul %104, %106, %cst_72 {dimension_numbers = #tpu.dot_dimension_numbers<[1], [0], [0], [1], [0, 0, 1, 1], [], []>} : vector<8x64xbf16>, vector<64x32xbf16>, vector<8x32xf32> -> vector<8x32xf32>
    %c0_73 = arith.constant 0 : index
    %c0_74 = arith.constant 0 : index
    %c0_75 = arith.constant 0 : index
    %108 = vector.load %arg18[%c0_73, %c0_74, %c0_75] : memref<1x1x32xf32, #tpu.memory_space<vmem>>, vector<1x1x32xf32>
    %109 = vector.shape_cast %108 : vector<1x1x32xf32> to vector<1x32xf32>
    %110 = vector.broadcast %109 : vector<1x32xf32> to vector<8x32xf32>
    %111 = arith.addf %107, %110 : vector<8x32xf32>
    %112 = arith.addf %111, %93 : vector<8x32xf32>
    %cst_76 = arith.constant dense<0.000000e+00> : vector<8xf32>
    %113 = vector.multi_reduction <add>, %112, %cst_76 [1] : vector<8x32xf32> to vector<8xf32>
    %114 = vector.shape_cast %113 : vector<8xf32> to vector<8x1xf32>
    %cst_77 = arith.constant 3.200000e+01 : f32
    %115 = vector.broadcast %cst_77 : f32 to vector<8x1xf32>
    %116 = arith.divf %114, %115 : vector<8x1xf32>
    %117 = vector.broadcast %116 : vector<8x1xf32> to vector<8x32xf32>
    %118 = arith.subf %112, %117 : vector<8x32xf32>
    %119 = arith.mulf %118, %118 : vector<8x32xf32>
    %cst_78 = arith.constant dense<0.000000e+00> : vector<8xf32>
    %120 = vector.multi_reduction <add>, %119, %cst_78 [1] : vector<8x32xf32> to vector<8xf32>
    %121 = vector.shape_cast %120 : vector<8xf32> to vector<8x1xf32>
    %cst_79 = arith.constant 3.200000e+01 : f32
    %122 = vector.broadcast %cst_79 : f32 to vector<8x1xf32>
    %123 = arith.divf %121, %122 : vector<8x1xf32>
    %124 = vector.broadcast %116 : vector<8x1xf32> to vector<8x32xf32>
    %125 = arith.subf %112, %124 : vector<8x32xf32>
    %cst_80 = arith.constant 9.99999974E-6 : f32
    %126 = vector.broadcast %cst_80 : f32 to vector<8x1xf32>
    %127 = arith.addf %123, %126 : vector<8x1xf32>
    %128 = math.rsqrt %127 : vector<8x1xf32>
    %129 = vector.broadcast %128 : vector<8x1xf32> to vector<8x32xf32>
    %130 = arith.mulf %125, %129 : vector<8x32xf32>
    %c0_81 = arith.constant 0 : index
    %c0_82 = arith.constant 0 : index
    %c0_83 = arith.constant 0 : index
    %131 = vector.load %arg19[%c0_81, %c0_82, %c0_83] : memref<1x1x32xf32, #tpu.memory_space<vmem>>, vector<1x1x32xf32>
    %132 = vector.shape_cast %131 : vector<1x1x32xf32> to vector<1x32xf32>
    %133 = vector.broadcast %132 : vector<1x32xf32> to vector<8x32xf32>
    %134 = arith.mulf %130, %133 : vector<8x32xf32>
    %c0_84 = arith.constant 0 : index
    %c0_85 = arith.constant 0 : index
    %c0_86 = arith.constant 0 : index
    %135 = vector.load %arg20[%c0_84, %c0_85, %c0_86] : memref<1x1x32xf32, #tpu.memory_space<vmem>>, vector<1x1x32xf32>
    %136 = vector.shape_cast %135 : vector<1x1x32xf32> to vector<1x32xf32>
    %137 = vector.broadcast %136 : vector<1x32xf32> to vector<8x32xf32>
    %138 = arith.addf %134, %137 : vector<8x32xf32>
    %139 = vector.broadcast %6 : vector<8x1xf32> to vector<8x32xf32>
    %140 = arith.mulf %138, %139 : vector<8x32xf32>
    %c0_87 = arith.constant 0 : index
    %c0_88 = arith.constant 0 : index
    %141 = vector.load %arg22[%c0_87, %c0_88] : memref<8x32xf32, #tpu.memory_space<vmem>>, vector<8x32xf32>
    tpu.vector_store %arg22[%c0_87, %c0_88], %140 {strides = array<i32>} : memref<8x32xf32, #tpu.memory_space<vmem>>, vector<8x32xf32>,
    %c0_89 = arith.constant 0 : index
    %c0_90 = arith.constant 0 : index
    %c0_91 = arith.constant 0 : index
    %142 = vector.load %arg21[%c0_89, %c0_90, %c0_91] : memref<1x8x32xf32, #tpu.memory_space<vmem>>, vector<1x8x32xf32>
    %143 = vector.shape_cast %142 : vector<1x8x32xf32> to vector<8x32xf32>
    %144 = vector.shape_cast %140 : vector<8x32xf32> to vector<1x8x32xf32>
    tpu.vector_store %arg21[%c0_89, %c0_90, %c0_91], %144 {strides = array<i32>} : memref<1x8x32xf32, #tpu.memory_space<vmem>>, vector<1x8x32xf32>,
    return
  }
  func.func @transform_0(%arg0: i32, %arg1: i32) -> (i32, i32, i32) {
    %c0_i32 = arith.constant 0 : i32
    %c0_i32_0 = arith.constant 0 : i32
    %c0_i32_1 = arith.constant 0 : i32
    return %arg0, %c0_i32, %c0_i32_0 : i32, i32, i32
  }
  func.func @transform_1(%arg0: i32, %arg1: i32) -> (i32, i32, i32) {
    %c0_i32 = arith.constant 0 : i32
    %c0_i32_0 = arith.constant 0 : i32
    %c0_i32_1 = arith.constant 0 : i32
    return %arg0, %c0_i32, %c0_i32_0 : i32, i32, i32
  }
  func.func @transform_2(%arg0: i32, %arg1: i32) -> (i32, i32, i32) {
    %c0_i32 = arith.constant 0 : i32
    %c0_i32_0 = arith.constant 0 : i32
    %c0_i32_1 = arith.constant 0 : i32
    return %arg0, %c0_i32, %c0_i32_0 : i32, i32, i32
  }
  func.func @transform_3(%arg0: i32, %arg1: i32) -> (i32, i32, i32, i32) {
    %c0_i32 = arith.constant 0 : i32
    %c0_i32_0 = arith.constant 0 : i32
    %c0_i32_1 = arith.constant 0 : i32
    %c0_i32_2 = arith.constant 0 : i32
    return %arg1, %c0_i32, %c0_i32_0, %c0_i32_1 : i32, i32, i32, i32
  }
  func.func @transform_4(%arg0: i32, %arg1: i32) -> (i32, i32, i32, i32) {
    %c0_i32 = arith.constant 0 : i32
    %c0_i32_0 = arith.constant 0 : i32
    %c0_i32_1 = arith.constant 0 : i32
    %c0_i32_2 = arith.constant 0 : i32
    return %arg1, %c0_i32, %c0_i32_0, %c0_i32_1 : i32, i32, i32, i32
  }
  func.func @transform_5(%arg0: i32, %arg1: i32) -> (i32, i32, i32, i32) {
    %c0_i32 = arith.constant 0 : i32
    %c0_i32_0 = arith.constant 0 : i32
    %c0_i32_1 = arith.constant 0 : i32
    %c0_i32_2 = arith.constant 0 : i32
    return %arg1, %c0_i32, %c0_i32_0, %c0_i32_1 : i32, i32, i32, i32
  }
  func.func @transform_6(%arg0: i32, %arg1: i32) -> (i32, i32, i32, i32) {
    %c0_i32 = arith.constant 0 : i32
    %c0_i32_0 = arith.constant 0 : i32
    %c0_i32_1 = arith.constant 0 : i32
    %c0_i32_2 = arith.constant 0 : i32
    return %arg1, %c0_i32, %c0_i32_0, %c0_i32_1 : i32, i32, i32, i32
  }
  func.func @transform_7(%arg0: i32, %arg1: i32) -> (i32, i32, i32, i32) {
    %c0_i32 = arith.constant 0 : i32
    %c0_i32_0 = arith.constant 0 : i32
    %c0_i32_1 = arith.constant 0 : i32
    %c0_i32_2 = arith.constant 0 : i32
    return %arg1, %c0_i32, %c0_i32_0, %c0_i32_1 : i32, i32, i32, i32
  }
  func.func @transform_8(%arg0: i32, %arg1: i32) -> (i32, i32, i32, i32) {
    %c0_i32 = arith.constant 0 : i32
    %c0_i32_0 = arith.constant 0 : i32
    %c0_i32_1 = arith.constant 0 : i32
    %c0_i32_2 = arith.constant 0 : i32
    return %arg1, %c0_i32, %c0_i32_0, %c0_i32_1 : i32, i32, i32, i32
  }
  func.func @transform_9(%arg0: i32, %arg1: i32) -> (i32, i32, i32, i32) {
    %c0_i32 = arith.constant 0 : i32
    %c0_i32_0 = arith.constant 0 : i32
    %c0_i32_1 = arith.constant 0 : i32
    %c0_i32_2 = arith.constant 0 : i32
    return %arg1, %c0_i32, %c0_i32_0, %c0_i32_1 : i32, i32, i32, i32
  }
  func.func @transform_10(%arg0: i32, %arg1: i32) -> (i32, i32, i32) {
    %c0_i32 = arith.constant 0 : i32
    %c0_i32_0 = arith.constant 0 : i32
    %c0_i32_1 = arith.constant 0 : i32
    return %arg1, %c0_i32, %c0_i32_0 : i32, i32, i32
  }
  func.func @transform_11(%arg0: i32, %arg1: i32) -> (i32, i32, i32) {
    %c0_i32 = arith.constant 0 : i32
    %c0_i32_0 = arith.constant 0 : i32
    %c0_i32_1 = arith.constant 0 : i32
    return %arg1, %c0_i32, %c0_i32_0 : i32, i32, i32
  }
  func.func @transform_12(%arg0: i32, %arg1: i32) -> (i32, i32, i32) {
    %c0_i32 = arith.constant 0 : i32
    %c0_i32_0 = arith.constant 0 : i32
    %c0_i32_1 = arith.constant 0 : i32
    return %arg1, %c0_i32, %c0_i32_0 : i32, i32, i32
  }
  func.func @transform_13(%arg0: i32, %arg1: i32) -> (i32, i32, i32) {
    %c0_i32 = arith.constant 0 : i32
    %c0_i32_0 = arith.constant 0 : i32
    %c0_i32_1 = arith.constant 0 : i32
    return %arg1, %c0_i32, %c0_i32_0 : i32, i32, i32
  }
  func.func @transform_14(%arg0: i32, %arg1: i32) -> (i32, i32, i32) {
    %c0_i32 = arith.constant 0 : i32
    %c0_i32_0 = arith.constant 0 : i32
    %c0_i32_1 = arith.constant 0 : i32
    return %arg1, %c0_i32, %c0_i32_0 : i32, i32, i32
  }
  func.func @transform_15(%arg0: i32, %arg1: i32) -> (i32, i32, i32) {
    %c0_i32 = arith.constant 0 : i32
    %c0_i32_0 = arith.constant 0 : i32
    %c0_i32_1 = arith.constant 0 : i32
    return %arg1, %c0_i32, %c0_i32_0 : i32, i32, i32
  }
  func.func @transform_16(%arg0: i32, %arg1: i32) -> (i32, i32, i32) {
    %c0_i32 = arith.constant 0 : i32
    %c0_i32_0 = arith.constant 0 : i32
    %c0_i32_1 = arith.constant 0 : i32
    return %arg1, %c0_i32, %c0_i32_0 : i32, i32, i32
  }
  func.func @transform_17(%arg0: i32, %arg1: i32) -> (i32, i32, i32) {
    %c0_i32 = arith.constant 0 : i32
    %c0_i32_0 = arith.constant 0 : i32
    %c0_i32_1 = arith.constant 0 : i32
    return %arg1, %c0_i32, %c0_i32_0 : i32, i32, i32
  }
  func.func @transform_18(%arg0: i32, %arg1: i32) -> (i32, i32, i32) {
    %c0_i32 = arith.constant 0 : i32
    %c0_i32_0 = arith.constant 0 : i32
    %c0_i32_1 = arith.constant 0 : i32
    return %arg1, %c0_i32, %c0_i32_0 : i32, i32, i32
  }
  func.func @transform_19(%arg0: i32, %arg1: i32) -> (i32, i32, i32) {
    %c0_i32 = arith.constant 0 : i32
    %c0_i32_0 = arith.constant 0 : i32
    %c0_i32_1 = arith.constant 0 : i32
    return %arg0, %c0_i32, %c0_i32_0 : i32, i32, i32
  }
}

</mosaic_0001>

<llo_original>
// kernel: tpu_custom_call.1
$region0: #{tpu_custom_call.1}
  #allocation0 [shape = 'u32[]', space=smem, size = 0x4, offset = 0x4, fixed_abs, tag = 'smem constant byte address 0x4 - core index']
  #allocation1 [shape = 'u32[72,128]{1,0:T(1,128)}', space=vmem, size = 0x9000, scoped, tag = 'internal scratch']
  #allocation2 [shape = 'f32[8,32]{1,0:T(8,128)}', space=vmem, size = 0x1000, scoped, tag = 'scratch operand']
  %s0 = inlined_call_operand.vmem [shape: f32[2,1,8], index: 0, kind: input, shape index: {}]
  %s1 = inlined_call_operand.vmem [shape: f32[2,8,1], index: 1, kind: input, shape index: {}]
  %s2 = inlined_call_operand.vmem [shape: f32[2,8,32], index: 2, kind: input, shape index: {}]
  %s3 = inlined_call_operand.vmem [shape: bf16[2,4,32,8], index: 3, kind: input, shape index: {}]
  %s4 = inlined_call_operand.vmem [shape: f32[2,4,1,8], index: 4, kind: input, shape index: {}]
  %s5 = inlined_call_operand.vmem [shape: bf16[2,4,32,8], index: 5, kind: input, shape index: {}]
  %s6 = inlined_call_operand.vmem [shape: f32[2,4,1,8], index: 6, kind: input, shape index: {}]
  %s7 = inlined_call_operand.vmem [shape: bf16[2,4,32,8], index: 7, kind: input, shape index: {}]
  %s8 = inlined_call_operand.vmem [shape: f32[2,4,1,8], index: 8, kind: input, shape index: {}]
  %s9 = inlined_call_operand.vmem [shape: bf16[2,4,8,32], index: 9, kind: input, shape index: {}]
  %s10 = inlined_call_operand.vmem [shape: f32[2,1,32], index: 10, kind: input, shape index: {}]
  %s11 = inlined_call_operand.vmem [shape: f32[2,1,32], index: 11, kind: input, shape index: {}]
  %s12 = inlined_call_operand.vmem [shape: f32[2,1,32], index: 12, kind: input, shape index: {}]
  %s13 = inlined_call_operand.vmem [shape: bf16[2,32,64], index: 13, kind: input, shape index: {}]
  %s14 = inlined_call_operand.vmem [shape: f32[2,1,64], index: 14, kind: input, shape index: {}]
  %s15 = inlined_call_operand.vmem [shape: bf16[2,64,32], index: 15, kind: input, shape index: {}]
  %s16 = inlined_call_operand.vmem [shape: f32[2,1,32], index: 16, kind: input, shape index: {}]
  %s17 = inlined_call_operand.vmem [shape: f32[2,1,32], index: 17, kind: input, shape index: {}]
  %s18 = inlined_call_operand.vmem [shape: f32[2,1,32], index: 18, kind: input, shape index: {}]
  %s19 = inlined_call_operand.hbm [shape: f32[2,8,32], index: 19, kind: output, shape index: {}]
  %s20 = sld [smem:[#allocation0]]
  $region113: #{tpu_custom_call.1} parent=0
    _
  %s22 = ssub.s32 1, %s20
  %s23 = scalar_select 0, %s22, %s20
  $region1: #{tpu_custom_call.1} parent=0
    #allocation3 [shape = 'u8[8192]{0}', space=vmem, size = 0x2000, scoped, tag = 'output window, operand 0']
    #allocation4 [shape = 's32[2]{0}', space=sflag, size = 0x8, scoped, tag = 'scoped memory for tpu_custom_call.1']
    %24 = vsyncpa [#allocation4], 0
    %s25 = scalar_lea.sflag [#allocation4], 1
    %26 = vsyncpa %s25, 0
    loop: start=0, step=1, limit=6
    $region2: #{tpu_custom_call.1} parent=1 // loop_pre_header
      _
    $region3: #{tpu_custom_call.1} parent=1 // loop_header
      %s28 = sphi 0, %s32
      %p29 = scmp.ge.s32.totalorder %s28, 6
      %s35 = sphi 0, %s47
      %s36 = sphi 0, %s43
      %s37 = sphi 0, %s35
      %s38 = sphi 0, %s36
      %s39 = sphi 0, %s37
      %s40 = sphi 0, %s38
      %s50 = sphi 0, %s52
      %s53 = sphi 0, %s50
      %s54 = sphi 0, %s53
      %s70 = sphi 0, %s54
      %s76 = sphi 0, %s78
      %s79 = sphi 0, %s76
      %s80 = sphi 0, %s79
      %s96 = sphi 0, %s80
      %s102 = sphi 0, %s104
      %s105 = sphi 0, %s102
      %s106 = sphi 0, %s105
      %s122 = sphi 0, %s106
      %s128 = sphi 0, %s130
      %s131 = sphi 0, %s128
      %s132 = sphi 0, %s131
      %s148 = sphi 0, %s132
      %s154 = sphi 0, %s156
      %s157 = sphi 0, %s154
      %s158 = sphi 0, %s157
      %s174 = sphi 0, %s158
      %s180 = sphi 0, %s182
      %s183 = sphi 0, %s180
      %s184 = sphi 0, %s183
      %s200 = sphi 0, %s184
      %s206 = sphi 0, %s208
      %s209 = sphi 0, %s206
      %s210 = sphi 0, %s209
      %s226 = sphi 0, %s210
      %s232 = sphi 0, %s234
      %s235 = sphi 0, %s232
      %s236 = sphi 0, %s235
      %s252 = sphi 0, %s236
      %s258 = sphi 0, %s260
      %s261 = sphi 0, %s258
      %s262 = sphi 0, %s261
      %s278 = sphi 0, %s262
      %s284 = sphi 0, %s286
      %s287 = sphi 0, %s284
      %s288 = sphi 0, %s287
      %s304 = sphi 0, %s288
      %s310 = sphi 0, %s312
      %s313 = sphi 0, %s310
      %s314 = sphi 0, %s313
      %s330 = sphi 0, %s314
      %s336 = sphi 0, %s338
      %s339 = sphi 0, %s336
      %s340 = sphi 0, %s339
      %s356 = sphi 0, %s340
      %s362 = sphi 0, %s364
      %s365 = sphi 0, %s362
      %s366 = sphi 0, %s365
      %s382 = sphi 0, %s366
      %s388 = sphi 0, %s390
      %s391 = sphi 0, %s388
      %s392 = sphi 0, %s391
      %s408 = sphi 0, %s392
      %s414 = sphi 0, %s416
      %s417 = sphi 0, %s414
      %s418 = sphi 0, %s417
      %s434 = sphi 0, %s418
      %s440 = sphi 0, %s442
      %s443 = sphi 0, %s440
      %s444 = sphi 0, %s443
      %s460 = sphi 0, %s444
      %s466 = sphi 0, %s468
      %s469 = sphi 0, %s466
      %s470 = sphi 0, %s469
      %s486 = sphi 0, %s470
      %s492 = sphi 0, %s494
      %s495 = sphi 0, %s492
      %s496 = sphi 0, %s495
      %s512 = sphi 0, %s496
      %s518 = sphi 0, %s520
      %s521 = sphi 0, %s518
      %s522 = sphi 0, %s521
      %s538 = sphi 0, %s522
      %s544 = sphi 0, %s546
      %s547 = sphi 0, %s544
      %s548 = sphi 0, %s547
      %s564 = sphi 0, %s548
    $region4: #{tpu_custom_call.1} parent=1 // loop_header_branch
      %31 = sbr.rel (%p29) target = $region8
    $region5: #{tpu_custom_call.1} parent=1 // loop_body
      %s33 = ssub.s32 %s28, 1
      %s34 = ssub.s32 %s28, 2
      %s41 = sadd.s32 1, %s36
      %p42 = scmp.ge.s32.totalorder %s41, 2
      %s43 = scalar_select %p42, 0, %s41
      %s44 = sadd.s32 1, %s35
      %s45 = scalar_select %p42, %s44, %s35
      %p46 = scmp.ge.s32.totalorder %s45, 2
      %s47 = scalar_select %p46, 0, %s45
      %s48 = ssub.s32 %s35, %s47
      %p49 = scmp.eq.s32.totalorder %s48, 0
      %s51 = sadd.s32 %s50, 1
      %s52 = scalar_select %p49, %s50, %s51
      %p55 = pneg %p49
      %p56 = scmp.eq.s32.totalorder %s28, 3
      %p57 = por %p55, %p56
      %p58 = scmp.ne.s32.totalorder %s50, %s53
      %p59 = scmp.eq.s32.totalorder %s28, 0
      %p60 = por %p58, %p59
      %p61 = scmp.ne.s32.totalorder %s50, %s53
      %p62 = scmp.eq.s32.totalorder %s33, 3
      %p63 = por %p61, %p62
      %p64 = scmp.ne.s32.totalorder %s53, %s54
      %p65 = scmp.eq.s32.totalorder %s33, 0
      %p66 = por %p64, %p65
      %p67 = scmp.ne.s32.totalorder %s53, %s54
      %p68 = scmp.eq.s32.totalorder %s34, 3
      %p69 = por %p67, %p68
      %p71 = scmp.ne.s32.totalorder %s54, %s70
      %p72 = scmp.eq.s32.totalorder %s34, 0
      %p73 = por %p71, %p72
      %s74 = ssub.s32 %s35, %s47
      %p75 = scmp.eq.s32.totalorder %s74, 0
      %s77 = sadd.s32 %s76, 1
      %s78 = scalar_select %p75, %s76, %s77
      %p81 = pneg %p75
      %p82 = scmp.eq.s32.totalorder %s28, 3
      %p83 = por %p81, %p82
      %p84 = scmp.ne.s32.totalorder %s76, %s79
      %p85 = scmp.eq.s32.totalorder %s28, 0
      %p86 = por %p84, %p85
      %p87 = scmp.ne.s32.totalorder %s76, %s79
      %p88 = scmp.eq.s32.totalorder %s33, 3
      %p89 = por %p87, %p88
      %p90 = scmp.ne.s32.totalorder %s79, %s80
      %p91 = scmp.eq.s32.totalorder %s33, 0
      %p92 = por %p90, %p91
      %p93 = scmp.ne.s32.totalorder %s79, %s80
      %p94 = scmp.eq.s32.totalorder %s34, 3
      %p95 = por %p93, %p94
      %p97 = scmp.ne.s32.totalorder %s80, %s96
      %p98 = scmp.eq.s32.totalorder %s34, 0
      %p99 = por %p97, %p98
      %s100 = ssub.s32 %s35, %s47
      %p101 = scmp.eq.s32.totalorder %s100, 0
      %s103 = sadd.s32 %s102, 1
      %s104 = scalar_select %p101, %s102, %s103
      %p107 = pneg %p101
      %p108 = scmp.eq.s32.totalorder %s28, 3
      %p109 = por %p107, %p108
      %p110 = scmp.ne.s32.totalorder %s102, %s105
      %p111 = scmp.eq.s32.totalorder %s28, 0
      %p112 = por %p110, %p111
      %p113 = scmp.ne.s32.totalorder %s102, %s105
      %p114 = scmp.eq.s32.totalorder %s33, 3
      %p115 = por %p113, %p114
      %p116 = scmp.ne.s32.totalorder %s105, %s106
      %p117 = scmp.eq.s32.totalorder %s33, 0
      %p118 = por %p116, %p117
      %p119 = scmp.ne.s32.totalorder %s105, %s106
      %p120 = scmp.eq.s32.totalorder %s34, 3
      %p121 = por %p119, %p120
      %p123 = scmp.ne.s32.totalorder %s106, %s122
      %p124 = scmp.eq.s32.totalorder %s34, 0
      %p125 = por %p123, %p124
      %s126 = ssub.s32 %s36, %s43
      %p127 = scmp.eq.s32.totalorder %s126, 0
      %s129 = sadd.s32 %s128, 1
      %s130 = scalar_select %p127, %s128, %s129
      %p133 = pneg %p127
      %p134 = scmp.eq.s32.totalorder %s28, 3
      %p135 = por %p133, %p134
      %p136 = scmp.ne.s32.totalorder %s128, %s131
      %p137 = scmp.eq.s32.totalorder %s28, 0
      %p138 = por %p136, %p137
      %p139 = scmp.ne.s32.totalorder %s128, %s131
      %p140 = scmp.eq.s32.totalorder %s33, 3
      %p141 = por %p139, %p140
      %p142 = scmp.ne.s32.totalorder %s131, %s132
      %p143 = scmp.eq.s32.totalorder %s33, 0
      %p144 = por %p142, %p143
      %p145 = scmp.ne.s32.totalorder %s131, %s132
      %p146 = scmp.eq.s32.totalorder %s34, 3
      %p147 = por %p145, %p146
      %p149 = scmp.ne.s32.totalorder %s132, %s148
      %p150 = scmp.eq.s32.totalorder %s34, 0
      %p151 = por %p149, %p150
      %s152 = ssub.s32 %s36, %s43
      %p153 = scmp.eq.s32.totalorder %s152, 0
      %s155 = sadd.s32 %s154, 1
      %s156 = scalar_select %p153, %s154, %s155
      %p159 = pneg %p153
      %p160 = scmp.eq.s32.totalorder %s28, 3
      %p161 = por %p159, %p160
      %p162 = scmp.ne.s32.totalorder %s154, %s157
      %p163 = scmp.eq.s32.totalorder %s28, 0
      %p164 = por %p162, %p163
      %p165 = scmp.ne.s32.totalorder %s154, %s157
      %p166 = scmp.eq.s32.totalorder %s33, 3
      %p167 = por %p165, %p166
      %p168 = scmp.ne.s32.totalorder %s157, %s158
      %p169 = scmp.eq.s32.totalorder %s33, 0
      %p170 = por %p168, %p169
      %p171 = scmp.ne.s32.totalorder %s157, %s158
      %p172 = scmp.eq.s32.totalorder %s34, 3
      %p173 = por %p171, %p172
      %p175 = scmp.ne.s32.totalorder %s158, %s174
      %p176 = scmp.eq.s32.totalorder %s34, 0
      %p177 = por %p175, %p176
      %s178 = ssub.s32 %s36, %s43
      %p179 = scmp.eq.s32.totalorder %s178, 0
      %s181 = sadd.s32 %s180, 1
      %s182 = scalar_select %p179, %s180, %s181
      %p185 = pneg %p179
      %p186 = scmp.eq.s32.totalorder %s28, 3
      %p187 = por %p185, %p186
      %p188 = scmp.ne.s32.totalorder %s180, %s183
      %p189 = scmp.eq.s32.totalorder %s28, 0
      %p190 = por %p188, %p189
      %p191 = scmp.ne.s32.totalorder %s180, %s183
      %p192 = scmp.eq.s32.totalorder %s33, 3
      %p193 = por %p191, %p192
      %p194 = scmp.ne.s32.totalorder %s183, %s184
      %p195 = scmp.eq.s32.totalorder %s33, 0
      %p196 = por %p194, %p195
      %p197 = scmp.ne.s32.totalorder %s183, %s184
      %p198 = scmp.eq.s32.totalorder %s34, 3
      %p199 = por %p197, %p198
      %p201 = scmp.ne.s32.totalorder %s184, %s200
      %p202 = scmp.eq.s32.totalorder %s34, 0
      %p203 = por %p201, %p202
      %s204 = ssub.s32 %s36, %s43
      %p205 = scmp.eq.s32.totalorder %s204, 0
      %s207 = sadd.s32 %s206, 1
      %s208 = scalar_select %p205, %s206, %s207
      %p211 = pneg %p205
      %p212 = scmp.eq.s32.totalorder %s28, 3
      %p213 = por %p211, %p212
      %p214 = scmp.ne.s32.totalorder %s206, %s209
      %p215 = scmp.eq.s32.totalorder %s28, 0
      %p216 = por %p214, %p215
      %p217 = scmp.ne.s32.totalorder %s206, %s209
      %p218 = scmp.eq.s32.totalorder %s33, 3
      %p219 = por %p217, %p218
      %p220 = scmp.ne.s32.totalorder %s209, %s210
      %p221 = scmp.eq.s32.totalorder %s33, 0
      %p222 = por %p220, %p221
      %p223 = scmp.ne.s32.totalorder %s209, %s210
      %p224 = scmp.eq.s32.totalorder %s34, 3
      %p225 = por %p223, %p224
      %p227 = scmp.ne.s32.totalorder %s210, %s226
      %p228 = scmp.eq.s32.totalorder %s34, 0
      %p229 = por %p227, %p228
      %s230 = ssub.s32 %s36, %s43
      %p231 = scmp.eq.s32.totalorder %s230, 0
      %s233 = sadd.s32 %s232, 1
      %s234 = scalar_select %p231, %s232, %s233
      %p237 = pneg %p231
      %p238 = scmp.eq.s32.totalorder %s28, 3
      %p239 = por %p237, %p238
      %p240 = scmp.ne.s32.totalorder %s232, %s235
      %p241 = scmp.eq.s32.totalorder %s28, 0
      %p242 = por %p240, %p241
      %p243 = scmp.ne.s32.totalorder %s232, %s235
      %p244 = scmp.eq.s32.totalorder %s33, 3
      %p245 = por %p243, %p244
      %p246 = scmp.ne.s32.totalorder %s235, %s236
      %p247 = scmp.eq.s32.totalorder %s33, 0
      %p248 = por %p246, %p247
      %p249 = scmp.ne.s32.totalorder %s235, %s236
      %p250 = scmp.eq.s32.totalorder %s34, 3
      %p251 = por %p249, %p250
      %p253 = scmp.ne.s32.totalorder %s236, %s252
      %p254 = scmp.eq.s32.totalorder %s34, 0
      %p255 = por %p253, %p254
      %s256 = ssub.s32 %s36, %s43
      %p257 = scmp.eq.s32.totalorder %s256, 0
      %s259 = sadd.s32 %s258, 1
      %s260 = scalar_select %p257, %s258, %s259
      %p263 = pneg %p257
      %p264 = scmp.eq.s32.totalorder %s28, 3
      %p265 = por %p263, %p264
      %p266 = scmp.ne.s32.totalorder %s258, %s261
      %p267 = scmp.eq.s32.totalorder %s28, 0
      %p268 = por %p266, %p267
      %p269 = scmp.ne.s32.totalorder %s258, %s261
      %p270 = scmp.eq.s32.totalorder %s33, 3
      %p271 = por %p269, %p270
      %p272 = scmp.ne.s32.totalorder %s261, %s262
      %p273 = scmp.eq.s32.totalorder %s33, 0
      %p274 = por %p272, %p273
      %p275 = scmp.ne.s32.totalorder %s261, %s262
      %p276 = scmp.eq.s32.totalorder %s34, 3
      %p277 = por %p275, %p276
      %p279 = scmp.ne.s32.totalorder %s262, %s278
      %p280 = scmp.eq.s32.totalorder %s34, 0
      %p281 = por %p279, %p280
      %s282 = ssub.s32 %s36, %s43
      %p283 = scmp.eq.s32.totalorder %s282, 0
      %s285 = sadd.s32 %s284, 1
      %s286 = scalar_select %p283, %s284, %s285
      %p289 = pneg %p283
      %p290 = scmp.eq.s32.totalorder %s28, 3
      %p291 = por %p289, %p290
      %p292 = scmp.ne.s32.totalorder %s284, %s287
      %p293 = scmp.eq.s32.totalorder %s28, 0
      %p294 = por %p292, %p293
      %p295 = scmp.ne.s32.totalorder %s284, %s287
      %p296 = scmp.eq.s32.totalorder %s33, 3
      %p297 = por %p295, %p296
      %p298 = scmp.ne.s32.totalorder %s287, %s288
      %p299 = scmp.eq.s32.totalorder %s33, 0
      %p300 = por %p298, %p299
      %p301 = scmp.ne.s32.totalorder %s287, %s288
      %p302 = scmp.eq.s32.totalorder %s34, 3
      %p303 = por %p301, %p302
      %p305 = scmp.ne.s32.totalorder %s288, %s304
      %p306 = scmp.eq.s32.totalorder %s34, 0
      %p307 = por %p305, %p306
      %s308 = ssub.s32 %s36, %s43
      %p309 = scmp.eq.s32.totalorder %s308, 0
      %s311 = sadd.s32 %s310, 1
      %s312 = scalar_select %p309, %s310, %s311
      %p315 = pneg %p309
      %p316 = scmp.eq.s32.totalorder %s28, 3
      %p317 = por %p315, %p316
      %p318 = scmp.ne.s32.totalorder %s310, %s313
      %p319 = scmp.eq.s32.totalorder %s28, 0
      %p320 = por %p318, %p319
      %p321 = scmp.ne.s32.totalorder %s310, %s313
      %p322 = scmp.eq.s32.totalorder %s33, 3
      %p323 = por %p321, %p322
      %p324 = scmp.ne.s32.totalorder %s313, %s314
      %p325 = scmp.eq.s32.totalorder %s33, 0
      %p326 = por %p324, %p325
      %p327 = scmp.ne.s32.totalorder %s313, %s314
      %p328 = scmp.eq.s32.totalorder %s34, 3
      %p329 = por %p327, %p328
      %p331 = scmp.ne.s32.totalorder %s314, %s330
      %p332 = scmp.eq.s32.totalorder %s34, 0
      %p333 = por %p331, %p332
      %s334 = ssub.s32 %s36, %s43
      %p335 = scmp.eq.s32.totalorder %s334, 0
      %s337 = sadd.s32 %s336, 1
      %s338 = scalar_select %p335, %s336, %s337
      %p341 = pneg %p335
      %p342 = scmp.eq.s32.totalorder %s28, 3
      %p343 = por %p341, %p342
      %p344 = scmp.ne.s32.totalorder %s336, %s339
      %p345 = scmp.eq.s32.totalorder %s28, 0
      %p346 = por %p344, %p345
      %p347 = scmp.ne.s32.totalorder %s336, %s339
      %p348 = scmp.eq.s32.totalorder %s33, 3
      %p349 = por %p347, %p348
      %p350 = scmp.ne.s32.totalorder %s339, %s340
      %p351 = scmp.eq.s32.totalorder %s33, 0
      %p352 = por %p350, %p351
      %p353 = scmp.ne.s32.totalorder %s339, %s340
      %p354 = scmp.eq.s32.totalorder %s34, 3
      %p355 = por %p353, %p354
      %p357 = scmp.ne.s32.totalorder %s340, %s356
      %p358 = scmp.eq.s32.totalorder %s34, 0
      %p359 = por %p357, %p358
      %s360 = ssub.s32 %s36, %s43
      %p361 = scmp.eq.s32.totalorder %s360, 0
      %s363 = sadd.s32 %s362, 1
      %s364 = scalar_select %p361, %s362, %s363
      %p367 = pneg %p361
      %p368 = scmp.eq.s32.totalorder %s28, 3
      %p369 = por %p367, %p368
      %p370 = scmp.ne.s32.totalorder %s362, %s365
      %p371 = scmp.eq.s32.totalorder %s28, 0
      %p372 = por %p370, %p371
      %p373 = scmp.ne.s32.totalorder %s362, %s365
      %p374 = scmp.eq.s32.totalorder %s33, 3
      %p375 = por %p373, %p374
      %p376 = scmp.ne.s32.totalorder %s365, %s366
      %p377 = scmp.eq.s32.totalorder %s33, 0
      %p378 = por %p376, %p377
      %p379 = scmp.ne.s32.totalorder %s365, %s366
      %p380 = scmp.eq.s32.totalorder %s34, 3
      %p381 = por %p379, %p380
      %p383 = scmp.ne.s32.totalorder %s366, %s382
      %p384 = scmp.eq.s32.totalorder %s34, 0
      %p385 = por %p383, %p384
      %s386 = ssub.s32 %s36, %s43
      %p387 = scmp.eq.s32.totalorder %s386, 0
      %s389 = sadd.s32 %s388, 1
      %s390 = scalar_select %p387, %s388, %s389
      %p393 = pneg %p387
      %p394 = scmp.eq.s32.totalorder %s28, 3
      %p395 = por %p393, %p394
      %p396 = scmp.ne.s32.totalorder %s388, %s391
      %p397 = scmp.eq.s32.totalorder %s28, 0
      %p398 = por %p396, %p397
      %p399 = scmp.ne.s32.totalorder %s388, %s391
      %p400 = scmp.eq.s32.totalorder %s33, 3
      %p401 = por %p399, %p400
      %p402 = scmp.ne.s32.totalorder %s391, %s392
      %p403 = scmp.eq.s32.totalorder %s33, 0
      %p404 = por %p402, %p403
      %p405 = scmp.ne.s32.totalorder %s391, %s392
      %p406 = scmp.eq.s32.totalorder %s34, 3
      %p407 = por %p405, %p406
      %p409 = scmp.ne.s32.totalorder %s392, %s408
      %p410 = scmp.eq.s32.totalorder %s34, 0
      %p411 = por %p409, %p410
      %s412 = ssub.s32 %s36, %s43
      %p413 = scmp.eq.s32.totalorder %s412, 0
      %s415 = sadd.s32 %s414, 1
      %s416 = scalar_select %p413, %s414, %s415
      %p419 = pneg %p413
      %p420 = scmp.eq.s32.totalorder %s28, 3
      %p421 = por %p419, %p420
      %p422 = scmp.ne.s32.totalorder %s414, %s417
      %p423 = scmp.eq.s32.totalorder %s28, 0
      %p424 = por %p422, %p423
      %p425 = scmp.ne.s32.totalorder %s414, %s417
      %p426 = scmp.eq.s32.totalorder %s33, 3
      %p427 = por %p425, %p426
      %p428 = scmp.ne.s32.totalorder %s417, %s418
      %p429 = scmp.eq.s32.totalorder %s33, 0
      %p430 = por %p428, %p429
      %p431 = scmp.ne.s32.totalorder %s417, %s418
      %p432 = scmp.eq.s32.totalorder %s34, 3
      %p433 = por %p431, %p432
      %p435 = scmp.ne.s32.totalorder %s418, %s434
      %p436 = scmp.eq.s32.totalorder %s34, 0
      %p437 = por %p435, %p436
      %s438 = ssub.s32 %s36, %s43
      %p439 = scmp.eq.s32.totalorder %s438, 0
      %s441 = sadd.s32 %s440, 1
      %s442 = scalar_select %p439, %s440, %s441
      %p445 = pneg %p439
      %p446 = scmp.eq.s32.totalorder %s28, 3
      %p447 = por %p445, %p446
      %p448 = scmp.ne.s32.totalorder %s440, %s443
      %p449 = scmp.eq.s32.totalorder %s28, 0
      %p450 = por %p448, %p449
      %p451 = scmp.ne.s32.totalorder %s440, %s443
      %p452 = scmp.eq.s32.totalorder %s33, 3
      %p453 = por %p451, %p452
      %p454 = scmp.ne.s32.totalorder %s443, %s444
      %p455 = scmp.eq.s32.totalorder %s33, 0
      %p456 = por %p454, %p455
      %p457 = scmp.ne.s32.totalorder %s443, %s444
      %p458 = scmp.eq.s32.totalorder %s34, 3
      %p459 = por %p457, %p458
      %p461 = scmp.ne.s32.totalorder %s444, %s460
      %p462 = scmp.eq.s32.totalorder %s34, 0
      %p463 = por %p461, %p462
      %s464 = ssub.s32 %s36, %s43
      %p465 = scmp.eq.s32.totalorder %s464, 0
      %s467 = sadd.s32 %s466, 1
      %s468 = scalar_select %p465, %s466, %s467
      %p471 = pneg %p465
      %p472 = scmp.eq.s32.totalorder %s28, 3
      %p473 = por %p471, %p472
      %p474 = scmp.ne.s32.totalorder %s466, %s469
      %p475 = scmp.eq.s32.totalorder %s28, 0
      %p476 = por %p474, %p475
      %p477 = scmp.ne.s32.totalorder %s466, %s469
      %p478 = scmp.eq.s32.totalorder %s33, 3
      %p479 = por %p477, %p478
      %p480 = scmp.ne.s32.totalorder %s469, %s470
      %p481 = scmp.eq.s32.totalorder %s33, 0
      %p482 = por %p480, %p481
      %p483 = scmp.ne.s32.totalorder %s469, %s470
      %p484 = scmp.eq.s32.totalorder %s34, 3
      %p485 = por %p483, %p484
      %p487 = scmp.ne.s32.totalorder %s470, %s486
      %p488 = scmp.eq.s32.totalorder %s34, 0
      %p489 = por %p487, %p488
      %s490 = ssub.s32 %s36, %s43
      %p491 = scmp.eq.s32.totalorder %s490, 0
      %s493 = sadd.s32 %s492, 1
      %s494 = scalar_select %p491, %s492, %s493
      %p497 = pneg %p491
      %p498 = scmp.eq.s32.totalorder %s28, 3
      %p499 = por %p497, %p498
      %p500 = scmp.ne.s32.totalorder %s492, %s495
      %p501 = scmp.eq.s32.totalorder %s28, 0
      %p502 = por %p500, %p501
      %p503 = scmp.ne.s32.totalorder %s492, %s495
      %p504 = scmp.eq.s32.totalorder %s33, 3
      %p505 = por %p503, %p504
      %p506 = scmp.ne.s32.totalorder %s495, %s496
      %p507 = scmp.eq.s32.totalorder %s33, 0
      %p508 = por %p506, %p507
      %p509 = scmp.ne.s32.totalorder %s495, %s496
      %p510 = scmp.eq.s32.totalorder %s34, 3
      %p511 = por %p509, %p510
      %p513 = scmp.ne.s32.totalorder %s496, %s512
      %p514 = scmp.eq.s32.totalorder %s34, 0
      %p515 = por %p513, %p514
      %s516 = ssub.s32 %s36, %s43
      %p517 = scmp.eq.s32.totalorder %s516, 0
      %s519 = sadd.s32 %s518, 1
      %s520 = scalar_select %p517, %s518, %s519
      %p523 = pneg %p517
      %p524 = scmp.eq.s32.totalorder %s28, 3
      %p525 = por %p523, %p524
      %p526 = scmp.ne.s32.totalorder %s518, %s521
      %p527 = scmp.eq.s32.totalorder %s28, 0
      %p528 = por %p526, %p527
      %p529 = scmp.ne.s32.totalorder %s518, %s521
      %p530 = scmp.eq.s32.totalorder %s33, 3
      %p531 = por %p529, %p530
      %p532 = scmp.ne.s32.totalorder %s521, %s522
      %p533 = scmp.eq.s32.totalorder %s33, 0
      %p534 = por %p532, %p533
      %p535 = scmp.ne.s32.totalorder %s521, %s522
      %p536 = scmp.eq.s32.totalorder %s34, 3
      %p537 = por %p535, %p536
      %p539 = scmp.ne.s32.totalorder %s522, %s538
      %p540 = scmp.eq.s32.totalorder %s34, 0
      %p541 = por %p539, %p540
      %s542 = ssub.s32 %s35, %s47
      %p543 = scmp.eq.s32.totalorder %s542, 0
      %s545 = sadd.s32 %s544, 1
      %s546 = scalar_select %p543, %s544, %s545
      %p549 = pneg %p543
      %p550 = scmp.eq.s32.totalorder %s28, 3
      %p551 = por %p549, %p550
      %p552 = scmp.ne.s32.totalorder %s544, %s547
      %p553 = scmp.eq.s32.totalorder %s28, 0
      %p554 = por %p552, %p553
      %p555 = scmp.ne.s32.totalorder %s544, %s547
      %p556 = scmp.eq.s32.totalorder %s33, 3
      %p557 = por %p555, %p556
      %p558 = scmp.ne.s32.totalorder %s547, %s548
      %p559 = scmp.eq.s32.totalorder %s33, 0
      %p560 = por %p558, %p559
      %p561 = scmp.ne.s32.totalorder %s547, %s548
      %p562 = scmp.eq.s32.totalorder %s34, 3
      %p563 = por %p561, %p562
      %p565 = scmp.ne.s32.totalorder %s548, %s564
      %p566 = scmp.eq.s32.totalorder %s34, 0
      %p567 = por %p565, %p566
      %p568 = scmp.le.s32.totalorder 1, %s28
      %p569 = scmp.lt.s32.totalorder %s28, 5
      %p570 = pnand %p568, %p569
      %p571 = pneg %p570
      // Predicated region
      $region9: #{tpu_custom_call.1} parent=5 // pred_check
        _
      $region10: #{tpu_custom_call.1} parent=5 // pred_check_branch
        %573 = sbr.rel (%p570) target = $region12
      $region11: #{tpu_custom_call.1} parent=5 // pred_region
        %s574 = ssub.s32 %s28, 1
      $region12: #{tpu_custom_call.1} parent=5 // pred_fallthru
        _
      %p575 = scmp.lt.s32.totalorder %s28, 4
      // Predicated region
      $region13: #{tpu_custom_call.1} parent=5 // pred_check
        %p576 = pneg %p575
      $region14: #{tpu_custom_call.1} parent=5 // pred_check_branch
        %578 = sbr.rel (%p576) target = $region16
      $region15: #{tpu_custom_call.1} parent=5 // pred_region
        // Predicated region
        $region17: #{tpu_custom_call.1} parent=15 // pred_check
          %p579 = pneg %p60
        $region18: #{tpu_custom_call.1} parent=15 // pred_check_branch
          %581 = sbr.rel (%p579) target = $region20
        $region19: #{tpu_custom_call.1} parent=15 // pred_region
          %p582 = scmp.lt.s32.totalorder %s35, 1
          %s583 = scalar_select %p582, %s35, 1
          %s584 = scalar_lea.vmem %s0, %s583
        $region20: #{tpu_custom_call.1} parent=15 // pred_fallthru
          _
        // Predicated region
        $region21: #{tpu_custom_call.1} parent=15 // pred_check
          %p585 = pneg %p86
        $region22: #{tpu_custom_call.1} parent=15 // pred_check_branch
          %587 = sbr.rel (%p585) target = $region24
        $region23: #{tpu_custom_call.1} parent=15 // pred_region
          %p588 = scmp.lt.s32.totalorder %s35, 1
          %s589 = scalar_select %p588, %s35, 1
          %s590 = smul.addr %s589, 8
          %s591 = scalar_lea.vmem %s1, %s590
        $region24: #{tpu_custom_call.1} parent=15 // pred_fallthru
          _
        // Predicated region
        $region25: #{tpu_custom_call.1} parent=15 // pred_check
          %p592 = pneg %p112
        $region26: #{tpu_custom_call.1} parent=15 // pred_check_branch
          %594 = sbr.rel (%p592) target = $region28
        $region27: #{tpu_custom_call.1} parent=15 // pred_region
          %p595 = scmp.lt.s32.totalorder %s35, 1
          %s596 = scalar_select %p595, %s35, 1
          %s597 = smul.addr %s596, 8
          %s598 = scalar_lea.vmem %s2, %s597
        $region28: #{tpu_custom_call.1} parent=15 // pred_fallthru
          _
        // Predicated region
        $region29: #{tpu_custom_call.1} parent=15 // pred_check
          %p599 = pneg %p138
        $region30: #{tpu_custom_call.1} parent=15 // pred_check_branch
          %601 = sbr.rel (%p599) target = $region32
        $region31: #{tpu_custom_call.1} parent=15 // pred_region
          %p602 = scmp.lt.s32.totalorder %s36, 1
          %s603 = scalar_select %p602, %s36, 1
          %s604 = smul.addr %s603, 16
          %s605 = smul.addr %s604, 4
          %s606 = scalar_lea.vmem %s3, %s605
        $region32: #{tpu_custom_call.1} parent=15 // pred_fallthru
          _
        // Predicated region
        $region33: #{tpu_custom_call.1} parent=15 // pred_check
          %p607 = pneg %p164
        $region34: #{tpu_custom_call.1} parent=15 // pred_check_branch
          %609 = sbr.rel (%p607) target = $region36
        $region35: #{tpu_custom_call.1} parent=15 // pred_region
          %p610 = scmp.lt.s32.totalorder %s36, 1
          %s611 = scalar_select %p610, %s36, 1
          %s612 = smul.addr %s611, 4
          %s613 = scalar_lea.vmem %s4, %s612
        $region36: #{tpu_custom_call.1} parent=15 // pred_fallthru
          _
        // Predicated region
        $region37: #{tpu_custom_call.1} parent=15 // pred_check
          %p614 = pneg %p190
        $region38: #{tpu_custom_call.1} parent=15 // pred_check_branch
          %616 = sbr.rel (%p614) target = $region40
        $region39: #{tpu_custom_call.1} parent=15 // pred_region
          %p617 = scmp.lt.s32.totalorder %s36, 1
          %s618 = scalar_select %p617, %s36, 1
          %s619 = smul.addr %s618, 16
          %s620 = smul.addr %s619, 4
          %s621 = scalar_lea.vmem %s5, %s620
        $region40: #{tpu_custom_call.1} parent=15 // pred_fallthru
          _
        // Predicated region
        $region41: #{tpu_custom_call.1} parent=15 // pred_check
          %p622 = pneg %p216
        $region42: #{tpu_custom_call.1} parent=15 // pred_check_branch
          %624 = sbr.rel (%p622) target = $region44
        $region43: #{tpu_custom_call.1} parent=15 // pred_region
          %p625 = scmp.lt.s32.totalorder %s36, 1
          %s626 = scalar_select %p625, %s36, 1
          %s627 = smul.addr %s626, 4
          %s628 = scalar_lea.vmem %s6, %s627
        $region44: #{tpu_custom_call.1} parent=15 // pred_fallthru
          _
        // Predicated region
        $region45: #{tpu_custom_call.1} parent=15 // pred_check
          %p629 = pneg %p242
        $region46: #{tpu_custom_call.1} parent=15 // pred_check_branch
          %631 = sbr.rel (%p629) target = $region48
        $region47: #{tpu_custom_call.1} parent=15 // pred_region
          %p632 = scmp.lt.s32.totalorder %s36, 1
          %s633 = scalar_select %p632, %s36, 1
          %s634 = smul.addr %s633, 16
          %s635 = smul.addr %s634, 4
          %s636 = scalar_lea.vmem %s7, %s635
        $region48: #{tpu_custom_call.1} parent=15 // pred_fallthru
          _
        // Predicated region
        $region49: #{tpu_custom_call.1} parent=15 // pred_check
          %p637 = pneg %p268
        $region50: #{tpu_custom_call.1} parent=15 // pred_check_branch
          %639 = sbr.rel (%p637) target = $region52
        $region51: #{tpu_custom_call.1} parent=15 // pred_region
          %p640 = scmp.lt.s32.totalorder %s36, 1
          %s641 = scalar_select %p640, %s36, 1
          %s642 = smul.addr %s641, 4
          %s643 = scalar_lea.vmem %s8, %s642
        $region52: #{tpu_custom_call.1} parent=15 // pred_fallthru
          _
        // Predicated region
        $region53: #{tpu_custom_call.1} parent=15 // pred_check
          %p644 = pneg %p294
        $region54: #{tpu_custom_call.1} parent=15 // pred_check_branch
          %646 = sbr.rel (%p644) target = $region56
        $region55: #{tpu_custom_call.1} parent=15 // pred_region
          %p647 = scmp.lt.s32.totalorder %s36, 1
          %s648 = scalar_select %p647, %s36, 1
          %s649 = smul.addr %s648, 4
          %s650 = smul.addr %s649, 4
          %s651 = scalar_lea.vmem %s9, %s650
        $region56: #{tpu_custom_call.1} parent=15 // pred_fallthru
          _
        // Predicated region
        $region57: #{tpu_custom_call.1} parent=15 // pred_check
          %p652 = pneg %p320
        $region58: #{tpu_custom_call.1} parent=15 // pred_check_branch
          %654 = sbr.rel (%p652) target = $region60
        $region59: #{tpu_custom_call.1} parent=15 // pred_region
          %p655 = scmp.lt.s32.totalorder %s36, 1
          %s656 = scalar_select %p655, %s36, 1
          %s657 = scalar_lea.vmem %s10, %s656
        $region60: #{tpu_custom_call.1} parent=15 // pred_fallthru
          _
        // Predicated region
        $region61: #{tpu_custom_call.1} parent=15 // pred_check
          %p658 = pneg %p346
        $region62: #{tpu_custom_call.1} parent=15 // pred_check_branch
          %660 = sbr.rel (%p658) target = $region64
        $region63: #{tpu_custom_call.1} parent=15 // pred_region
          %p661 = scmp.lt.s32.totalorder %s36, 1
          %s662 = scalar_select %p661, %s36, 1
          %s663 = scalar_lea.vmem %s11, %s662
        $region64: #{tpu_custom_call.1} parent=15 // pred_fallthru
          _
        // Predicated region
        $region65: #{tpu_custom_call.1} parent=15 // pred_check
          %p664 = pneg %p372
        $region66: #{tpu_custom_call.1} parent=15 // pred_check_branch
          %666 = sbr.rel (%p664) target = $region68
        $region67: #{tpu_custom_call.1} parent=15 // pred_region
          %p667 = scmp.lt.s32.totalorder %s36, 1
          %s668 = scalar_select %p667, %s36, 1
          %s669 = scalar_lea.vmem %s12, %s668
        $region68: #{tpu_custom_call.1} parent=15 // pred_fallthru
          _
        // Predicated region
        $region69: #{tpu_custom_call.1} parent=15 // pred_check
          %p670 = pneg %p398
        $region70: #{tpu_custom_call.1} parent=15 // pred_check_branch
          %672 = sbr.rel (%p670) target = $region72
        $region71: #{tpu_custom_call.1} parent=15 // pred_region
          %p673 = scmp.lt.s32.totalorder %s36, 1
          %s674 = scalar_select %p673, %s36, 1
          %s675 = smul.addr %s674, 4
          %s676 = smul.addr %s675, 4
          %s677 = scalar_lea.vmem %s13, %s676
        $region72: #{tpu_custom_call.1} parent=15 // pred_fallthru
          _
        // Predicated region
        $region73: #{tpu_custom_call.1} parent=15 // pred_check
          %p678 = pneg %p424
        $region74: #{tpu_custom_call.1} parent=15 // pred_check_branch
          %680 = sbr.rel (%p678) target = $region76
        $region75: #{tpu_custom_call.1} parent=15 // pred_region
          %p681 = scmp.lt.s32.totalorder %s36, 1
          %s682 = scalar_select %p681, %s36, 1
          %s683 = scalar_lea.vmem %s14, %s682
        $region76: #{tpu_custom_call.1} parent=15 // pred_fallthru
          _
        // Predicated region
        $region77: #{tpu_custom_call.1} parent=15 // pred_check
          %p684 = pneg %p450
        $region78: #{tpu_custom_call.1} parent=15 // pred_check_branch
          %686 = sbr.rel (%p684) target = $region80
        $region79: #{tpu_custom_call.1} parent=15 // pred_region
          %p687 = scmp.lt.s32.totalorder %s36, 1
          %s688 = scalar_select %p687, %s36, 1
          %s689 = smul.addr %s688, 8
          %s690 = smul.addr %s689, 4
          %s691 = scalar_lea.vmem %s15, %s690
        $region80: #{tpu_custom_call.1} parent=15 // pred_fallthru
          _
        // Predicated region
        $region81: #{tpu_custom_call.1} parent=15 // pred_check
          %p692 = pneg %p476
        $region82: #{tpu_custom_call.1} parent=15 // pred_check_branch
          %694 = sbr.rel (%p692) target = $region84
        $region83: #{tpu_custom_call.1} parent=15 // pred_region
          %p695 = scmp.lt.s32.totalorder %s36, 1
          %s696 = scalar_select %p695, %s36, 1
          %s697 = scalar_lea.vmem %s16, %s696
        $region84: #{tpu_custom_call.1} parent=15 // pred_fallthru
          _
        // Predicated region
        $region85: #{tpu_custom_call.1} parent=15 // pred_check
          %p698 = pneg %p502
        $region86: #{tpu_custom_call.1} parent=15 // pred_check_branch
          %700 = sbr.rel (%p698) target = $region88
        $region87: #{tpu_custom_call.1} parent=15 // pred_region
          %p701 = scmp.lt.s32.totalorder %s36, 1
          %s702 = scalar_select %p701, %s36, 1
          %s703 = scalar_lea.vmem %s17, %s702
        $region88: #{tpu_custom_call.1} parent=15 // pred_fallthru
          _
        // Predicated region
        $region89: #{tpu_custom_call.1} parent=15 // pred_check
          %p704 = pneg %p528
        $region90: #{tpu_custom_call.1} parent=15 // pred_check_branch
          %706 = sbr.rel (%p704) target = $region92
        $region91: #{tpu_custom_call.1} parent=15 // pred_region
          %p707 = scmp.lt.s32.totalorder %s36, 1
          %s708 = scalar_select %p707, %s36, 1
          %s709 = scalar_lea.vmem %s18, %s708
        $region92: #{tpu_custom_call.1} parent=15 // pred_fallthru
          _
      $region16: #{tpu_custom_call.1} parent=5 // pred_fallthru
        _
      %p710 = scmp.le.s32.totalorder 1, %s28
      %p711 = scmp.lt.s32.totalorder %s28, 5
      %p712 = pnand %p710, %p711
      %p713 = pneg %p712
      // Predicated region
      $region93: #{tpu_custom_call.1} parent=5 // pred_check
        _
      $region94: #{tpu_custom_call.1} parent=5 // pred_check_branch
        %715 = sbr.rel (%p712) target = $region96
      $region95: #{tpu_custom_call.1} parent=5 // pred_region
        %s716 = ssub.s32 %s28, 1
        %p717 = scmp.lt.s32.totalorder %s37, 1
        %s718 = scalar_select %p717, %s37, 1
        %s719 = scalar_lea.vmem %s0, %s718
        %p720 = pneg %p66
        %p721 = pneg %p63
        %p722 = scmp.lt.s32.totalorder %s37, 1
        %s723 = scalar_select %p722, %s37, 1
        %s724 = smul.addr %s723, 8
        %s725 = scalar_lea.vmem %s1, %s724
        %p726 = pneg %p92
        %p727 = pneg %p89
        %p728 = scmp.lt.s32.totalorder %s37, 1
        %s729 = scalar_select %p728, %s37, 1
        %s730 = smul.addr %s729, 8
        %s731 = scalar_lea.vmem %s2, %s730
        %p732 = pneg %p118
        %p733 = pneg %p115
        %p734 = scmp.lt.s32.totalorder %s38, 1
        %s735 = scalar_select %p734, %s38, 1
        %s736 = smul.addr %s735, 16
        %s737 = smul.addr %s736, 4
        %s738 = scalar_lea.vmem %s3, %s737
        %p739 = pneg %p144
        %p740 = pneg %p141
        %p741 = scmp.lt.s32.totalorder %s38, 1
        %s742 = scalar_select %p741, %s38, 1
        %s743 = smul.addr %s742, 4
        %s744 = scalar_lea.vmem %s4, %s743
        %p745 = pneg %p170
        %p746 = pneg %p167
        %p747 = scmp.lt.s32.totalorder %s38, 1
        %s748 = scalar_select %p747, %s38, 1
        %s749 = smul.addr %s748, 16
        %s750 = smul.addr %s749, 4
        %s751 = scalar_lea.vmem %s5, %s750
        %p752 = pneg %p196
        %p753 = pneg %p193
        %p754 = scmp.lt.s32.totalorder %s38, 1
        %s755 = scalar_select %p754, %s38, 1
        %s756 = smul.addr %s755, 4
        %s757 = scalar_lea.vmem %s6, %s756
        %p758 = pneg %p222
        %p759 = pneg %p219
        %p760 = scmp.lt.s32.totalorder %s38, 1
        %s761 = scalar_select %p760, %s38, 1
        %s762 = smul.addr %s761, 16
        %s763 = smul.addr %s762, 4
        %s764 = scalar_lea.vmem %s7, %s763
        %p765 = pneg %p248
        %p766 = pneg %p245
        %p767 = scmp.lt.s32.totalorder %s38, 1
        %s768 = scalar_select %p767, %s38, 1
        %s769 = smul.addr %s768, 4
        %s770 = scalar_lea.vmem %s8, %s769
        %p771 = pneg %p274
        %p772 = pneg %p271
        %p773 = scmp.lt.s32.totalorder %s38, 1
        %s774 = scalar_select %p773, %s38, 1
        %s775 = smul.addr %s774, 4
        %s776 = smul.addr %s775, 4
        %s777 = scalar_lea.vmem %s9, %s776
        %p778 = pneg %p300
        %p779 = pneg %p297
        %p780 = scmp.lt.s32.totalorder %s38, 1
        %s781 = scalar_select %p780, %s38, 1
        %s782 = scalar_lea.vmem %s10, %s781
        %p783 = pneg %p326
        %p784 = pneg %p323
        %p785 = scmp.lt.s32.totalorder %s38, 1
        %s786 = scalar_select %p785, %s38, 1
        %s787 = scalar_lea.vmem %s11, %s786
        %p788 = pneg %p352
        %p789 = pneg %p349
        %p790 = scmp.lt.s32.totalorder %s38, 1
        %s791 = scalar_select %p790, %s38, 1
        %s792 = scalar_lea.vmem %s12, %s791
        %p793 = pneg %p378
        %p794 = pneg %p375
        %p795 = scmp.lt.s32.totalorder %s38, 1
        %s796 = scalar_select %p795, %s38, 1
        %s797 = smul.addr %s796, 4
        %s798 = smul.addr %s797, 4
        %s799 = scalar_lea.vmem %s13, %s798
        %p800 = pneg %p404
        %p801 = pneg %p401
        %p802 = scmp.lt.s32.totalorder %s38, 1
        %s803 = scalar_select %p802, %s38, 1
        %s804 = scalar_lea.vmem %s14, %s803
        %p805 = pneg %p430
        %p806 = pneg %p427
        %p807 = scmp.lt.s32.totalorder %s38, 1
        %s808 = scalar_select %p807, %s38, 1
        %s809 = smul.addr %s808, 8
        %s810 = smul.addr %s809, 4
        %s811 = scalar_lea.vmem %s15, %s810
        %p812 = pneg %p456
        %p813 = pneg %p453
        %p814 = scmp.lt.s32.totalorder %s38, 1
        %s815 = scalar_select %p814, %s38, 1
        %s816 = scalar_lea.vmem %s16, %s815
        %p817 = pneg %p482
        %p818 = pneg %p479
        %p819 = scmp.lt.s32.totalorder %s38, 1
        %s820 = scalar_select %p819, %s38, 1
        %s821 = scalar_lea.vmem %s17, %s820
        %p822 = pneg %p508
        %p823 = pneg %p505
        %p824 = scmp.lt.s32.totalorder %s38, 1
        %s825 = scalar_select %p824, %s38, 1
        %s826 = scalar_lea.vmem %s18, %s825
        %p827 = pneg %p534
        %p828 = pneg %p531
        %p829 = pneg %p560
        %p830 = pneg %p557
        %s831 = sand.u32 %s547, 1
        %s832 = scalar_lea.sflag [#allocation4], %s831
        %s833 = sand.u32 %s547, 1
        %s834 = smul.addr %s833, 8
        %s835 = scalar_lea.vmem [#allocation3], %s834
        %p836 = scmp.lt.s32.totalorder %s37, 1
        %s837 = scalar_select %p836, %s37, 1
        %s838 = scalar_lea.vmem %s0, %s837
        %p839 = scmp.lt.s32.totalorder %s37, 1
        %s840 = scalar_select %p839, %s37, 1
        %s841 = smul.addr %s840, 8
        %s842 = scalar_lea.vmem %s1, %s841
        %p843 = scmp.lt.s32.totalorder %s37, 1
        %s844 = scalar_select %p843, %s37, 1
        %s845 = smul.addr %s844, 8
        %s846 = scalar_lea.vmem %s2, %s845
        %p847 = scmp.lt.s32.totalorder %s38, 1
        %s848 = scalar_select %p847, %s38, 1
        %s849 = smul.addr %s848, 16
        %s850 = smul.addr %s849, 4
        %s851 = scalar_lea.vmem %s3, %s850
        %p852 = scmp.lt.s32.totalorder %s38, 1
        %s853 = scalar_select %p852, %s38, 1
        %s854 = smul.addr %s853, 4
        %s855 = scalar_lea.vmem %s4, %s854
        %p856 = scmp.lt.s32.totalorder %s38, 1
        %s857 = scalar_select %p856, %s38, 1
        %s858 = smul.addr %s857, 16
        %s859 = smul.addr %s858, 4
        %s860 = scalar_lea.vmem %s5, %s859
        %p861 = scmp.lt.s32.totalorder %s38, 1
        %s862 = scalar_select %p861, %s38, 1
        %s863 = smul.addr %s862, 4
        %s864 = scalar_lea.vmem %s6, %s863
        %p865 = scmp.lt.s32.totalorder %s38, 1
        %s866 = scalar_select %p865, %s38, 1
        %s867 = smul.addr %s866, 16
        %s868 = smul.addr %s867, 4
        %s869 = scalar_lea.vmem %s7, %s868
        %p870 = scmp.lt.s32.totalorder %s38, 1
        %s871 = scalar_select %p870, %s38, 1
        %s872 = smul.addr %s871, 4
        %s873 = scalar_lea.vmem %s8, %s872
        %p874 = scmp.lt.s32.totalorder %s38, 1
        %s875 = scalar_select %p874, %s38, 1
        %s876 = smul.addr %s875, 4
        %s877 = smul.addr %s876, 4
        %s878 = scalar_lea.vmem %s9, %s877
        %p879 = scmp.lt.s32.totalorder %s38, 1
        %s880 = scalar_select %p879, %s38, 1
        %s881 = scalar_lea.vmem %s10, %s880
        %p882 = scmp.lt.s32.totalorder %s38, 1
        %s883 = scalar_select %p882, %s38, 1
        %s884 = scalar_lea.vmem %s11, %s883
        %p885 = scmp.lt.s32.totalorder %s38, 1
        %s886 = scalar_select %p885, %s38, 1
        %s887 = scalar_lea.vmem %s12, %s886
        %p888 = scmp.lt.s32.totalorder %s38, 1
        %s889 = scalar_select %p888, %s38, 1
        %s890 = smul.addr %s889, 4
        %s891 = smul.addr %s890, 4
        %s892 = scalar_lea.vmem %s13, %s891
        %p893 = scmp.lt.s32.totalorder %s38, 1
        %s894 = scalar_select %p893, %s38, 1
        %s895 = scalar_lea.vmem %s14, %s894
        %p896 = scmp.lt.s32.totalorder %s38, 1
        %s897 = scalar_select %p896, %s38, 1
        %s898 = smul.addr %s897, 8
        %s899 = smul.addr %s898, 4
        %s900 = scalar_lea.vmem %s15, %s899
        %p901 = scmp.lt.s32.totalorder %s38, 1
        %s902 = scalar_select %p901, %s38, 1
        %s903 = scalar_lea.vmem %s16, %s902
        %p904 = scmp.lt.s32.totalorder %s38, 1
        %s905 = scalar_select %p904, %s38, 1
        %s906 = scalar_lea.vmem %s17, %s905
        %p907 = scmp.lt.s32.totalorder %s38, 1
        %s908 = scalar_select %p907, %s38, 1
        %s909 = scalar_lea.vmem %s18, %s908
        %p911 = scmp.eq.s32.totalorder %s38, 0
        // Predicated region
        $region97: #{tpu_custom_call.1} parent=95 // pred_check
          %p912 = pneg %p911
        $region98: #{tpu_custom_call.1} parent=95 // pred_check_branch
          %914 = sbr.rel (%p912) target = $region100
        $region99: #{tpu_custom_call.1} parent=95 // pred_region
          %v915 = vld [vmem:[%s846] sm:$0xff]
          %vm916 = vcmask 261120
          %917 = vst.msk [vmem:[#allocation2] sm:$0xff] %vm916, %v915
        $region100: #{tpu_custom_call.1} parent=95 // pred_fallthru
          _
        %v918 = vld [vmem:[#allocation2] sm:$0xff]
        %v919 = vld [vmem:[%s838] sm:$0x1]
        %v920 = vld [vmem:[%s842] sm:$0xff]
        %v921 = vpack.c.bf16 %v918, %v918
        %v922 = vld [vmem:[%s851] sm:$0xf]
        %v923 = vld [vmem:[%s851 + $0x4] sm:$0xf]
        %v924 = vld [vmem:[%s851 + $0x8] sm:$0xf]
        %v925 = vld [vmem:[%s851 + $0xc] sm:$0xf]
        %v926 = vld [vmem:[%s851 + $0x10] sm:$0xf]
        %v927 = vld [vmem:[%s851 + $0x14] sm:$0xf]
        %v928 = vld [vmem:[%s851 + $0x18] sm:$0xf]
        %v929 = vld [vmem:[%s851 + $0x1c] sm:$0xf]
        %v930 = vld [vmem:[%s851 + $0x20] sm:$0xf]
        %v931 = vld [vmem:[%s851 + $0x24] sm:$0xf]
        %v932 = vld [vmem:[%s851 + $0x28] sm:$0xf]
        %v933 = vld [vmem:[%s851 + $0x2c] sm:$0xf]
        %v934 = vld [vmem:[%s851 + $0x30] sm:$0xf]
        %v935 = vld [vmem:[%s851 + $0x34] sm:$0xf]
        %v936 = vld [vmem:[%s851 + $0x38] sm:$0xf]
        %v937 = vld [vmem:[%s851 + $0x3c] sm:$0xf]
        %v938 = vld [vmem:[%s855] sm:$0x1]
        %v939 = vld [vmem:[%s855 + $0x1] sm:$0x1]
        %v940 = vld [vmem:[%s855 + $0x2] sm:$0x1]
        %v941 = vld [vmem:[%s855 + $0x3] sm:$0x1]
        %v946 = vperm.slane %v938, 0
        %v947 = vperm.slane %v939, 0
        %v948 = vperm.slane %v940, 0
        %v949 = vperm.slane %v941, 0
        %v958 = vunpack.c.l.b16 %v922
        %v959 = vunpack.c.l.b16 %v923
        %v960 = vunpack.c.l.b16 %v924
        %v961 = vunpack.c.l.b16 %v925
        %v962 = vpack.c.b16 %v959, %v958
        %v963 = vpack.c.b16 %v961, %v960
        %vm966 = vcmask 261120
        %v968 = vsel %vm966, %v921, 0
        %970 = vmatpush.bf16.msra.mxu0 0
        %971 = vmatpush.bf16.msra.mxu0 0
        %972 = vmatpush.bf16.msra.mxu0 0
        %973 = vmatpush.bf16.msra.mxu0 0
        %974 = vmatpush.bf16.msra.mxu0 0
        %975 = vmatpush.bf16.msra.mxu0 0
        %976 = vmatpush.bf16.msra.mxu0 %v963
        %977 = vmatpush.bf16.msra.mxu0 %v962
        %978 = vmatmul.bf16.gmra.mxu0 %v968
        %v979 = vpop.f32.mrf.mxu0
        %v980 = vadd.f32 %v946, %v979
        %v981 = vpop.f32.mrf.mxu0
        %982 = vdwg.mxu0
        %v987 = vunpack.c.l.b16 %v926
        %v988 = vunpack.c.l.b16 %v927
        %v989 = vunpack.c.l.b16 %v928
        %v990 = vunpack.c.l.b16 %v929
        %v991 = vpack.c.b16 %v988, %v987
        %v992 = vpack.c.b16 %v990, %v989
        %995 = vmatpush.bf16.msra.mxu0 0
        %996 = vmatpush.bf16.msra.mxu0 0
        %997 = vmatpush.bf16.msra.mxu0 0
        %998 = vmatpush.bf16.msra.mxu0 0
        %999 = vmatpush.bf16.msra.mxu0 0
        %1000 = vmatpush.bf16.msra.mxu0 0
        %1001 = vmatpush.bf16.msra.mxu0 %v992
        %1002 = vmatpush.bf16.msra.mxu0 %v991
        %1003 = vmatmul.bf16.gmra.mxu0 %v968
        %v1004 = vpop.f32.mrf.mxu0
        %v1005 = vadd.f32 %v947, %v1004
        %v1006 = vpop.f32.mrf.mxu0
        %1007 = vdwg.mxu0
        %v1012 = vunpack.c.l.b16 %v930
        %v1013 = vunpack.c.l.b16 %v931
        %v1014 = vunpack.c.l.b16 %v932
        %v1015 = vunpack.c.l.b16 %v933
        %v1016 = vpack.c.b16 %v1013, %v1012
        %v1017 = vpack.c.b16 %v1015, %v1014
        %1020 = vmatpush.bf16.msra.mxu0 0
        %1021 = vmatpush.bf16.msra.mxu0 0
        %1022 = vmatpush.bf16.msra.mxu0 0
        %1023 = vmatpush.bf16.msra.mxu0 0
        %1024 = vmatpush.bf16.msra.mxu0 0
        %1025 = vmatpush.bf16.msra.mxu0 0
        %1026 = vmatpush.bf16.msra.mxu0 %v1017
        %1027 = vmatpush.bf16.msra.mxu0 %v1016
        %1028 = vmatmul.bf16.gmra.mxu0 %v968
        %v1029 = vpop.f32.mrf.mxu0
        %v1030 = vadd.f32 %v948, %v1029
        %v1031 = vpop.f32.mrf.mxu0
        %1032 = vdwg.mxu0
        %v1037 = vunpack.c.l.b16 %v934
        %v1038 = vunpack.c.l.b16 %v935
        %v1039 = vunpack.c.l.b16 %v936
        %v1040 = vunpack.c.l.b16 %v937
        %v1041 = vpack.c.b16 %v1038, %v1037
        %v1042 = vpack.c.b16 %v1040, %v1039
        %1045 = vmatpush.bf16.msra.mxu0 0
        %1046 = vmatpush.bf16.msra.mxu0 0
        %1047 = vmatpush.bf16.msra.mxu0 0
        %1048 = vmatpush.bf16.msra.mxu0 0
        %1049 = vmatpush.bf16.msra.mxu0 0
        %1050 = vmatpush.bf16.msra.mxu0 0
        %1051 = vmatpush.bf16.msra.mxu0 %v1042
        %1052 = vmatpush.bf16.msra.mxu0 %v1041
        %1053 = vmatmul.bf16.gmra.mxu0 %v968
        %v1054 = vpop.f32.mrf.mxu0
        %v1055 = vadd.f32 %v949, %v1054
        %v1056 = vpop.f32.mrf.mxu0
        %1057 = vdwg.mxu0
        %v1058 = vld [vmem:[%s860] sm:$0xf]
        %v1059 = vld [vmem:[%s860 + $0x4] sm:$0xf]
        %v1060 = vld [vmem:[%s860 + $0x8] sm:$0xf]
        %v1061 = vld [vmem:[%s860 + $0xc] sm:$0xf]
        %v1062 = vld [vmem:[%s860 + $0x10] sm:$0xf]
        %v1063 = vld [vmem:[%s860 + $0x14] sm:$0xf]
        %v1064 = vld [vmem:[%s860 + $0x18] sm:$0xf]
        %v1065 = vld [vmem:[%s860 + $0x1c] sm:$0xf]
        %v1066 = vld [vmem:[%s860 + $0x20] sm:$0xf]
        %v1067 = vld [vmem:[%s860 + $0x24] sm:$0xf]
        %v1068 = vld [vmem:[%s860 + $0x28] sm:$0xf]
        %v1069 = vld [vmem:[%s860 + $0x2c] sm:$0xf]
        %v1070 = vld [vmem:[%s860 + $0x30] sm:$0xf]
        %v1071 = vld [vmem:[%s860 + $0x34] sm:$0xf]
        %v1072 = vld [vmem:[%s860 + $0x38] sm:$0xf]
        %v1073 = vld [vmem:[%s860 + $0x3c] sm:$0xf]
        %v1074 = vld [vmem:[%s864] sm:$0x1]
        %v1075 = vld [vmem:[%s864 + $0x1] sm:$0x1]
        %v1076 = vld [vmem:[%s864 + $0x2] sm:$0x1]
        %v1077 = vld [vmem:[%s864 + $0x3] sm:$0x1]
        %v1082 = vperm.slane %v1074, 0
        %v1083 = vperm.slane %v1075, 0
        %v1084 = vperm.slane %v1076, 0
        %v1085 = vperm.slane %v1077, 0
        %v1094 = vunpack.c.l.b16 %v1058
        %v1095 = vunpack.c.l.b16 %v1059
        %v1096 = vunpack.c.l.b16 %v1060
        %v1097 = vunpack.c.l.b16 %v1061
        %v1098 = vpack.c.b16 %v1095, %v1094
        %v1099 = vpack.c.b16 %v1097, %v1096
        %1102 = vmatpush.bf16.msra.mxu0 0
        %1103 = vmatpush.bf16.msra.mxu0 0
        %1104 = vmatpush.bf16.msra.mxu0 0
        %1105 = vmatpush.bf16.msra.mxu0 0
        %1106 = vmatpush.bf16.msra.mxu0 0
        %1107 = vmatpush.bf16.msra.mxu0 0
        %1108 = vmatpush.bf16.msra.mxu0 %v1099
        %1109 = vmatpush.bf16.msra.mxu0 %v1098
        %1110 = vmatmul.bf16.gmra.mxu0 %v968
        %v1111 = vpop.f32.mrf.mxu0
        %v1112 = vadd.f32 %v1082, %v1111
        %v1113 = vpop.f32.mrf.mxu0
        %1114 = vdwg.mxu0
        %v1119 = vunpack.c.l.b16 %v1062
        %v1120 = vunpack.c.l.b16 %v1063
        %v1121 = vunpack.c.l.b16 %v1064
        %v1122 = vunpack.c.l.b16 %v1065
        %v1123 = vpack.c.b16 %v1120, %v1119
        %v1124 = vpack.c.b16 %v1122, %v1121
        %1127 = vmatpush.bf16.msra.mxu0 0
        %1128 = vmatpush.bf16.msra.mxu0 0
        %1129 = vmatpush.bf16.msra.mxu0 0
        %1130 = vmatpush.bf16.msra.mxu0 0
        %1131 = vmatpush.bf16.msra.mxu0 0
        %1132 = vmatpush.bf16.msra.mxu0 0
        %1133 = vmatpush.bf16.msra.mxu0 %v1124
        %1134 = vmatpush.bf16.msra.mxu0 %v1123
        %1135 = vmatmul.bf16.gmra.mxu0 %v968
        %v1136 = vpop.f32.mrf.mxu0
        %v1137 = vadd.f32 %v1083, %v1136
        %v1138 = vpop.f32.mrf.mxu0
        %1139 = vdwg.mxu0
        %v1144 = vunpack.c.l.b16 %v1066
        %v1145 = vunpack.c.l.b16 %v1067
        %v1146 = vunpack.c.l.b16 %v1068
        %v1147 = vunpack.c.l.b16 %v1069
        %v1148 = vpack.c.b16 %v1145, %v1144
        %v1149 = vpack.c.b16 %v1147, %v1146
        %1152 = vmatpush.bf16.msra.mxu0 0
        %1153 = vmatpush.bf16.msra.mxu0 0
        %1154 = vmatpush.bf16.msra.mxu0 0
        %1155 = vmatpush.bf16.msra.mxu0 0
        %1156 = vmatpush.bf16.msra.mxu0 0
        %1157 = vmatpush.bf16.msra.mxu0 0
        %1158 = vmatpush.bf16.msra.mxu0 %v1149
        %1159 = vmatpush.bf16.msra.mxu0 %v1148
        %1160 = vmatmul.bf16.gmra.mxu0 %v968
        %v1161 = vpop.f32.mrf.mxu0
        %v1162 = vadd.f32 %v1084, %v1161
        %v1163 = vpop.f32.mrf.mxu0
        %1164 = vdwg.mxu0
        %v1169 = vunpack.c.l.b16 %v1070
        %v1170 = vunpack.c.l.b16 %v1071
        %v1171 = vunpack.c.l.b16 %v1072
        %v1172 = vunpack.c.l.b16 %v1073
        %v1173 = vpack.c.b16 %v1170, %v1169
        %v1174 = vpack.c.b16 %v1172, %v1171
        %1177 = vmatpush.bf16.msra.mxu0 0
        %1178 = vmatpush.bf16.msra.mxu0 0
        %1179 = vmatpush.bf16.msra.mxu0 0
        %1180 = vmatpush.bf16.msra.mxu0 0
        %1181 = vmatpush.bf16.msra.mxu0 0
        %1182 = vmatpush.bf16.msra.mxu0 0
        %1183 = vmatpush.bf16.msra.mxu0 %v1174
        %1184 = vmatpush.bf16.msra.mxu0 %v1173
        %1185 = vmatmul.bf16.gmra.mxu0 %v968
        %v1186 = vpop.f32.mrf.mxu0
        %v1187 = vadd.f32 %v1085, %v1186
        %v1188 = vpop.f32.mrf.mxu0
        %1189 = vdwg.mxu0
        %v1190 = vld [vmem:[%s869] sm:$0xf]
        %v1191 = vld [vmem:[%s869 + $0x4] sm:$0xf]
        %v1192 = vld [vmem:[%s869 + $0x8] sm:$0xf]
        %v1193 = vld [vmem:[%s869 + $0xc] sm:$0xf]
        %v1194 = vld [vmem:[%s869 + $0x10] sm:$0xf]
        %v1195 = vld [vmem:[%s869 + $0x14] sm:$0xf]
        %v1196 = vld [vmem:[%s869 + $0x18] sm:$0xf]
        %v1197 = vld [vmem:[%s869 + $0x1c] sm:$0xf]
        %v1198 = vld [vmem:[%s869 + $0x20] sm:$0xf]
        %v1199 = vld [vmem:[%s869 + $0x24] sm:$0xf]
        %v1200 = vld [vmem:[%s869 + $0x28] sm:$0xf]
        %v1201 = vld [vmem:[%s869 + $0x2c] sm:$0xf]
        %v1202 = vld [vmem:[%s869 + $0x30] sm:$0xf]
        %v1203 = vld [vmem:[%s869 + $0x34] sm:$0xf]
        %v1204 = vld [vmem:[%s869 + $0x38] sm:$0xf]
        %v1205 = vld [vmem:[%s869 + $0x3c] sm:$0xf]
        %v1206 = vld [vmem:[%s873] sm:$0x1]
        %v1207 = vld [vmem:[%s873 + $0x1] sm:$0x1]
        %v1208 = vld [vmem:[%s873 + $0x2] sm:$0x1]
        %v1209 = vld [vmem:[%s873 + $0x3] sm:$0x1]
        %v1214 = vperm.slane %v1206, 0
        %v1215 = vperm.slane %v1207, 0
        %v1216 = vperm.slane %v1208, 0
        %v1217 = vperm.slane %v1209, 0
        %v1226 = vunpack.c.l.b16 %v1190
        %v1227 = vunpack.c.l.b16 %v1191
        %v1228 = vunpack.c.l.b16 %v1192
        %v1229 = vunpack.c.l.b16 %v1193
        %v1230 = vpack.c.b16 %v1227, %v1226
        %v1231 = vpack.c.b16 %v1229, %v1228
        %1234 = vmatpush.bf16.msra.mxu0 0
        %1235 = vmatpush.bf16.msra.mxu0 0
        %1236 = vmatpush.bf16.msra.mxu0 0
        %1237 = vmatpush.bf16.msra.mxu0 0
        %1238 = vmatpush.bf16.msra.mxu0 0
        %1239 = vmatpush.bf16.msra.mxu0 0
        %1240 = vmatpush.bf16.msra.mxu0 %v1231
        %1241 = vmatpush.bf16.msra.mxu0 %v1230
        %1242 = vmatmul.bf16.gmra.mxu0 %v968
        %v1243 = vpop.f32.mrf.mxu0
        %v1244 = vadd.f32 %v1214, %v1243
        %v1245 = vpop.f32.mrf.mxu0
        %1246 = vdwg.mxu0
        %v1251 = vunpack.c.l.b16 %v1194
        %v1252 = vunpack.c.l.b16 %v1195
        %v1253 = vunpack.c.l.b16 %v1196
        %v1254 = vunpack.c.l.b16 %v1197
        %v1255 = vpack.c.b16 %v1252, %v1251
        %v1256 = vpack.c.b16 %v1254, %v1253
        %1259 = vmatpush.bf16.msra.mxu0 0
        %1260 = vmatpush.bf16.msra.mxu0 0
        %1261 = vmatpush.bf16.msra.mxu0 0
        %1262 = vmatpush.bf16.msra.mxu0 0
        %1263 = vmatpush.bf16.msra.mxu0 0
        %1264 = vmatpush.bf16.msra.mxu0 0
        %1265 = vmatpush.bf16.msra.mxu0 %v1256
        %1266 = vmatpush.bf16.msra.mxu0 %v1255
        %1267 = vmatmul.bf16.gmra.mxu0 %v968
        %v1268 = vpop.f32.mrf.mxu0
        %v1269 = vadd.f32 %v1215, %v1268
        %v1270 = vpop.f32.mrf.mxu0
        %1271 = vdwg.mxu0
        %v1276 = vunpack.c.l.b16 %v1198
        %v1277 = vunpack.c.l.b16 %v1199
        %v1278 = vunpack.c.l.b16 %v1200
        %v1279 = vunpack.c.l.b16 %v1201
        %v1280 = vpack.c.b16 %v1277, %v1276
        %v1281 = vpack.c.b16 %v1279, %v1278
        %1284 = vmatpush.bf16.msra.mxu0 0
        %1285 = vmatpush.bf16.msra.mxu0 0
        %1286 = vmatpush.bf16.msra.mxu0 0
        %1287 = vmatpush.bf16.msra.mxu0 0
        %1288 = vmatpush.bf16.msra.mxu0 0
        %1289 = vmatpush.bf16.msra.mxu0 0
        %1290 = vmatpush.bf16.msra.mxu0 %v1281
        %1291 = vmatpush.bf16.msra.mxu0 %v1280
        %1292 = vmatmul.bf16.gmra.mxu0 %v968
        %v1293 = vpop.f32.mrf.mxu0
        %v1294 = vadd.f32 %v1216, %v1293
        %v1295 = vpop.f32.mrf.mxu0
        %1296 = vdwg.mxu0
        %v1301 = vunpack.c.l.b16 %v1202
        %v1302 = vunpack.c.l.b16 %v1203
        %v1303 = vunpack.c.l.b16 %v1204
        %v1304 = vunpack.c.l.b16 %v1205
        %v1305 = vpack.c.b16 %v1302, %v1301
        %v1306 = vpack.c.b16 %v1304, %v1303
        %1309 = vmatpush.bf16.msra.mxu0 0
        %1310 = vmatpush.bf16.msra.mxu0 0
        %1311 = vmatpush.bf16.msra.mxu0 0
        %1312 = vmatpush.bf16.msra.mxu0 0
        %1313 = vmatpush.bf16.msra.mxu0 0
        %1314 = vmatpush.bf16.msra.mxu0 0
        %1315 = vmatpush.bf16.msra.mxu0 %v1306
        %1316 = vmatpush.bf16.msra.mxu0 %v1305
        %1317 = vmatmul.bf16.gmra.mxu0 %v968
        %v1318 = vpop.f32.mrf.mxu0
        %v1319 = vadd.f32 %v1217, %v1318
        %v1320 = vpop.f32.mrf.mxu0
        %1321 = vdwg.mxu0
        %v1322 = vpack.c.bf16 %v980, %v980
        %v1323 = vpack.c.bf16 %v1005, %v1005
        %v1324 = vpack.c.bf16 %v1030, %v1030
        %v1325 = vpack.c.bf16 %v1055, %v1055
        %v1326 = vpack.c.bf16 %v1112, %v1112
        %v1327 = vpack.c.bf16 %v1137, %v1137
        %v1328 = vpack.c.bf16 %v1162, %v1162
        %v1329 = vpack.c.bf16 %v1187, %v1187
        %vm1330 = vcmask 64512
        %v1332 = vsel %vm1330, %v1322, 0
        %v1335 = vsel %vm1330, %v1326, 0
        %1337 = vmatpush.bf16.xpose.msra.mxu0 0
        %1338 = vmatpush.bf16.xpose.msra.mxu0 0
        %1339 = vmatpush.bf16.xpose.msra.mxu0 0
        %1340 = vmatpush.bf16.xpose.msra.mxu0 0
        %1341 = vmatpush.bf16.xpose.msra.mxu0 0
        %1342 = vmatpush.bf16.xpose.msra.mxu0 0
        %1343 = vmatpush.bf16.xpose.msra.mxu0 0
        %1344 = vmatpush.bf16.xpose.msra.mxu0 %v1335
        %1345 = vmatmul.bf16.gmra.mxu0 %v1332
        %v1346 = vpop.f32.mrf.mxu0
        %v1347 = vadd.f32 0.0, %v1346
        %v1348 = vpop.f32.mrf.mxu0
        %1349 = vdwg.mxu0
        %v1351 = vsel %vm1330, %v1323, 0
        %v1354 = vsel %vm1330, %v1327, 0
        %1356 = vmatpush.bf16.xpose.msra.mxu0 0
        %1357 = vmatpush.bf16.xpose.msra.mxu0 0
        %1358 = vmatpush.bf16.xpose.msra.mxu0 0
        %1359 = vmatpush.bf16.xpose.msra.mxu0 0
        %1360 = vmatpush.bf16.xpose.msra.mxu0 0
        %1361 = vmatpush.bf16.xpose.msra.mxu0 0
        %1362 = vmatpush.bf16.xpose.msra.mxu0 0
        %1363 = vmatpush.bf16.xpose.msra.mxu0 %v1354
        %1364 = vmatmul.bf16.gmra.mxu0 %v1351
        %v1365 = vpop.f32.mrf.mxu0
        %v1366 = vadd.f32 0.0, %v1365
        %v1367 = vpop.f32.mrf.mxu0
        %1368 = vdwg.mxu0
        %v1370 = vsel %vm1330, %v1324, 0
        %v1373 = vsel %vm1330, %v1328, 0
        %1375 = vmatpush.bf16.xpose.msra.mxu0 0
        %1376 = vmatpush.bf16.xpose.msra.mxu0 0
        %1377 = vmatpush.bf16.xpose.msra.mxu0 0
        %1378 = vmatpush.bf16.xpose.msra.mxu0 0
        %1379 = vmatpush.bf16.xpose.msra.mxu0 0
        %1380 = vmatpush.bf16.xpose.msra.mxu0 0
        %1381 = vmatpush.bf16.xpose.msra.mxu0 0
        %1382 = vmatpush.bf16.xpose.msra.mxu0 %v1373
        %1383 = vmatmul.bf16.gmra.mxu0 %v1370
        %v1384 = vpop.f32.mrf.mxu0
        %v1385 = vadd.f32 0.0, %v1384
        %v1386 = vpop.f32.mrf.mxu0
        %1387 = vdwg.mxu0
        %v1389 = vsel %vm1330, %v1325, 0
        %v1392 = vsel %vm1330, %v1329, 0
        %1394 = vmatpush.bf16.xpose.msra.mxu0 0
        %1395 = vmatpush.bf16.xpose.msra.mxu0 0
        %1396 = vmatpush.bf16.xpose.msra.mxu0 0
        %1397 = vmatpush.bf16.xpose.msra.mxu0 0
        %1398 = vmatpush.bf16.xpose.msra.mxu0 0
        %1399 = vmatpush.bf16.xpose.msra.mxu0 0
        %1400 = vmatpush.bf16.xpose.msra.mxu0 0
        %1401 = vmatpush.bf16.xpose.msra.mxu0 %v1392
        %1402 = vmatmul.bf16.gmra.mxu0 %v1389
        %v1403 = vpop.f32.mrf.mxu0
        %v1404 = vadd.f32 0.0, %v1403
        %v1405 = vpop.f32.mrf.mxu0
        %1406 = vdwg.mxu0
        %v1407 = vmul.f32 %v1347, 0.35355338
        %v1408 = vmul.f32 %v1366, 0.35355338
        %v1409 = vmul.f32 %v1385, 0.35355338
        %v1410 = vmul.f32 %v1404, 0.35355338
        %vm1411 = vcmp.gt.f32.partialorder %v919, 0.5
        %v1412 = vsel %vm1411, 1, 0
        %v1413 = vperm.slane %v1412, 0
        %vm1414 = vcmp.eq.s32.totalorder %v1413, 1
        %v1415 = vsel %vm1414, -1e+30, %v1407
        %v1416 = vsel %vm1414, -1e+30, %v1408
        %v1417 = vsel %vm1414, -1e+30, %v1409
        %v1418 = vsel %vm1414, -1e+30, %v1410
        %v1419 = vsel %vm1330, %v1415, -inf
        %1420 = vmax.xlane.f32.xlu0 %v1419
        %v1421 = vpop.xlane.xlu0 %1420
        %v1422 = vsel %vm1330, %v1416, -inf
        %1423 = vmax.xlane.f32.xlu0 %v1422
        %v1424 = vpop.xlane.xlu0 %1423
        %v1425 = vsel %vm1330, %v1417, -inf
        %1426 = vmax.xlane.f32.xlu0 %v1425
        %v1427 = vpop.xlane.xlu0 %1426
        %v1428 = vsel %vm1330, %v1418, -inf
        %1429 = vmax.xlane.f32.xlu0 %v1428
        %v1430 = vpop.xlane.xlu0 %1429
        %v1431 = vsub.f32 %v1415, %v1421
        %v1432 = vsub.f32 %v1416, %v1424
        %v1433 = vsub.f32 %v1417, %v1427
        %v1434 = vsub.f32 %v1418, %v1430
        %v1435 = vmul.f32 %v1431, 1.442695
        %v1436 = vpow.pop %v1435
        %v1437 = vmul.f32 %v1432, 1.442695
        %v1438 = vpow.pop %v1437
        %v1439 = vmul.f32 %v1433, 1.442695
        %v1440 = vpow.pop %v1439
        %v1441 = vmul.f32 %v1434, 1.442695
        %v1442 = vpow.pop %v1441
        %v1443 = vsel %vm1330, %v1436, 0.0
        %1444 = vadd.xlane.f32.xlu0 %v1443
        %v1445 = vpop.xlane.xlu0 %1444
        %v1446 = vsel %vm1330, %v1438, 0.0
        %1447 = vadd.xlane.f32.xlu0 %v1446
        %v1448 = vpop.xlane.xlu0 %1447
        %v1449 = vsel %vm1330, %v1440, 0.0
        %1450 = vadd.xlane.f32.xlu0 %v1449
        %v1451 = vpop.xlane.xlu0 %1450
        %v1452 = vsel %vm1330, %v1442, 0.0
        %1453 = vadd.xlane.f32.xlu0 %v1452
        %v1454 = vpop.xlane.xlu0 %1453
        %v1455 = vrcp.pop %v1445
        %v1456 = vrcp.pop %v1448
        %v1457 = vrcp.pop %v1451
        %v1458 = vrcp.pop %v1454
        %v1459 = vmul.f32 %v1436, %v1455
        %v1460 = vmul.f32 %v1438, %v1456
        %v1461 = vmul.f32 %v1440, %v1457
        %v1462 = vmul.f32 %v1442, %v1458
        %v1463 = vpack.c.bf16 %v1459, %v1459
        %v1464 = vpack.c.bf16 %v1460, %v1460
        %v1465 = vpack.c.bf16 %v1461, %v1461
        %v1466 = vpack.c.bf16 %v1462, %v1462
        %v1467 = vpack.c.bf16 %v1244, %v1244
        %v1468 = vpack.c.bf16 %v1269, %v1269
        %v1469 = vpack.c.bf16 %v1294, %v1294
        %v1470 = vpack.c.bf16 %v1319, %v1319
        %v1472 = vsel %vm1330, %v1463, 0
        %vm1474 = vcmask 1043456
        %v1476 = vsel %vm1474, %v1467, 0
        %1478 = vmatpush.bf16.msra.mxu0 0
        %1479 = vmatpush.bf16.msra.mxu0 0
        %1480 = vmatpush.bf16.msra.mxu0 0
        %1481 = vmatpush.bf16.msra.mxu0 0
        %1482 = vmatpush.bf16.msra.mxu0 0
        %1483 = vmatpush.bf16.msra.mxu0 0
        %1484 = vmatpush.bf16.msra.mxu0 0
        %1485 = vmatpush.bf16.msra.mxu0 %v1476
        %1486 = vmatmul.bf16.gmra.mxu0 %v1472
        %v1487 = vpop.f32.mrf.mxu0
        %v1488 = vadd.f32 0.0, %v1487
        %v1489 = vpop.f32.mrf.mxu0
        %1490 = vdwg.mxu0
        %v1492 = vsel %vm1330, %v1464, 0
        %v1495 = vsel %vm1474, %v1468, 0
        %1497 = vmatpush.bf16.msra.mxu0 0
        %1498 = vmatpush.bf16.msra.mxu0 0
        %1499 = vmatpush.bf16.msra.mxu0 0
        %1500 = vmatpush.bf16.msra.mxu0 0
        %1501 = vmatpush.bf16.msra.mxu0 0
        %1502 = vmatpush.bf16.msra.mxu0 0
        %1503 = vmatpush.bf16.msra.mxu0 0
        %1504 = vmatpush.bf16.msra.mxu0 %v1495
        %1505 = vmatmul.bf16.gmra.mxu0 %v1492
        %v1506 = vpop.f32.mrf.mxu0
        %v1507 = vadd.f32 0.0, %v1506
        %v1508 = vpop.f32.mrf.mxu0
        %1509 = vdwg.mxu0
        %v1511 = vsel %vm1330, %v1465, 0
        %v1514 = vsel %vm1474, %v1469, 0
        %1516 = vmatpush.bf16.msra.mxu0 0
        %1517 = vmatpush.bf16.msra.mxu0 0
        %1518 = vmatpush.bf16.msra.mxu0 0
        %1519 = vmatpush.bf16.msra.mxu0 0
        %1520 = vmatpush.bf16.msra.mxu0 0
        %1521 = vmatpush.bf16.msra.mxu0 0
        %1522 = vmatpush.bf16.msra.mxu0 0
        %1523 = vmatpush.bf16.msra.mxu0 %v1514
        %1524 = vmatmul.bf16.gmra.mxu0 %v1511
        %v1525 = vpop.f32.mrf.mxu0
        %v1526 = vadd.f32 0.0, %v1525
        %v1527 = vpop.f32.mrf.mxu0
        %1528 = vdwg.mxu0
        %v1530 = vsel %vm1330, %v1466, 0
        %v1533 = vsel %vm1474, %v1470, 0
        %1535 = vmatpush.bf16.msra.mxu0 0
        %1536 = vmatpush.bf16.msra.mxu0 0
        %1537 = vmatpush.bf16.msra.mxu0 0
        %1538 = vmatpush.bf16.msra.mxu0 0
        %1539 = vmatpush.bf16.msra.mxu0 0
        %1540 = vmatpush.bf16.msra.mxu0 0
        %1541 = vmatpush.bf16.msra.mxu0 0
        %1542 = vmatpush.bf16.msra.mxu0 %v1533
        %1543 = vmatmul.bf16.gmra.mxu0 %v1530
        %v1544 = vpop.f32.mrf.mxu0
        %v1545 = vadd.f32 0.0, %v1544
        %v1546 = vpop.f32.mrf.mxu0
        %1547 = vdwg.mxu0
        %v1548 = vpack.c.bf16 %v1488, %v1488
        %v1549 = vpack.c.bf16 %v1507, %v1507
        %v1550 = vpack.c.bf16 %v1526, %v1526
        %v1551 = vpack.c.bf16 %v1545, %v1545
        %v1552 = vld [vmem:[%s878] sm:$0xf]
        %v1553 = vld [vmem:[%s878 + $0x4] sm:$0xf]
        %v1554 = vld [vmem:[%s878 + $0x8] sm:$0xf]
        %v1555 = vld [vmem:[%s878 + $0xc] sm:$0xf]
        %v1557 = vsel %vm1330, %v1548, 0
        %v1560 = vsel %vm1474, %v1552, 0
        %1562 = vmatpush.bf16.msra.mxu0 0
        %1563 = vmatpush.bf16.msra.mxu0 0
        %1564 = vmatpush.bf16.msra.mxu0 0
        %1565 = vmatpush.bf16.msra.mxu0 0
        %1566 = vmatpush.bf16.msra.mxu0 0
        %1567 = vmatpush.bf16.msra.mxu0 0
        %1568 = vmatpush.bf16.msra.mxu0 0
        %1569 = vmatpush.bf16.msra.mxu0 %v1560
        %1570 = vmatmul.bf16.gmra.mxu0 %v1557
        %v1571 = vpop.f32.mrf.mxu0
        %v1572 = vadd.f32 0.0, %v1571
        %v1573 = vpop.f32.mrf.mxu0
        %1574 = vdwg.mxu0
        %v1576 = vsel %vm1330, %v1549, 0
        %v1579 = vsel %vm1474, %v1553, 0
        %1581 = vmatpush.bf16.msra.mxu0 0
        %1582 = vmatpush.bf16.msra.mxu0 0
        %1583 = vmatpush.bf16.msra.mxu0 0
        %1584 = vmatpush.bf16.msra.mxu0 0
        %1585 = vmatpush.bf16.msra.mxu0 0
        %1586 = vmatpush.bf16.msra.mxu0 0
        %1587 = vmatpush.bf16.msra.mxu0 0
        %1588 = vmatpush.bf16.msra.mxu0 %v1579
        %1589 = vmatmul.bf16.gmra.mxu0 %v1576
        %v1590 = vpop.f32.mrf.mxu0
        %v1591 = vadd.f32 0.0, %v1590
        %v1592 = vpop.f32.mrf.mxu0
        %1593 = vdwg.mxu0
        %v1595 = vsel %vm1330, %v1550, 0
        %v1598 = vsel %vm1474, %v1554, 0
        %1600 = vmatpush.bf16.msra.mxu0 0
        %1601 = vmatpush.bf16.msra.mxu0 0
        %1602 = vmatpush.bf16.msra.mxu0 0
        %1603 = vmatpush.bf16.msra.mxu0 0
        %1604 = vmatpush.bf16.msra.mxu0 0
        %1605 = vmatpush.bf16.msra.mxu0 0
        %1606 = vmatpush.bf16.msra.mxu0 0
        %1607 = vmatpush.bf16.msra.mxu0 %v1598
        %1608 = vmatmul.bf16.gmra.mxu0 %v1595
        %v1609 = vpop.f32.mrf.mxu0
        %v1610 = vadd.f32 0.0, %v1609
        %v1611 = vpop.f32.mrf.mxu0
        %1612 = vdwg.mxu0
        %v1614 = vsel %vm1330, %v1551, 0
        %v1617 = vsel %vm1474, %v1555, 0
        %1619 = vmatpush.bf16.msra.mxu0 0
        %1620 = vmatpush.bf16.msra.mxu0 0
        %1621 = vmatpush.bf16.msra.mxu0 0
        %1622 = vmatpush.bf16.msra.mxu0 0
        %1623 = vmatpush.bf16.msra.mxu0 0
        %1624 = vmatpush.bf16.msra.mxu0 0
        %1625 = vmatpush.bf16.msra.mxu0 0
        %1626 = vmatpush.bf16.msra.mxu0 %v1617
        %1627 = vmatmul.bf16.gmra.mxu0 %v1614
        %v1628 = vpop.f32.mrf.mxu0
        %v1629 = vadd.f32 0.0, %v1628
        %v1630 = vpop.f32.mrf.mxu0
        %1631 = vdwg.mxu0
        %v1632 = vsel %vm966, %v1572, 0.0
        %v1633 = vsel %vm966, %v1591, 0.0
        %v1634 = vadd.f32 %v1632, %v1633
        %v1635 = vsel %vm966, %v1610, 0.0
        %v1636 = vadd.f32 %v1634, %v1635
        %v1637 = vsel %vm966, %v1629, 0.0
        %v1638 = vadd.f32 %v1636, %v1637
        %v1639 = vld [vmem:[%s881] sm:$0x1]
        %v1641 = vperm.slane %v1639, 0
        %v1643 = vadd.f32 %v1638, %v1641
        %v1644 = vadd.f32 %v1643, %v918
        %v1645 = vsel %vm966, %v1644, 0.0
        %1646 = vadd.xlane.f32.xlu0 %v1645
        %v1647 = vpop.xlane.xlu0 %1646
        %v1648 = vrcp.pop 32.0
        %v1649 = vmul.f32 32.0, %v1648
        %v1650 = vsub.f32 1.0, %v1649
        %v1651 = vmul.f32 %v1648, %v1650
        %v1652 = vadd.f32 %v1648, %v1651
        %vm1653 = vweird.f32 %v1648
        %v1654 = vsel %vm1653, %v1648, %v1652
        %v1655 = vmul.f32 %v1647, %v1654
        %v1656 = vsub.f32 %v1644, %v1655
        %v1657 = vmul.f32 %v1656, %v1656
        %v1658 = vsel %vm966, %v1657, 0.0
        %1659 = vadd.xlane.f32.xlu0 %v1658
        %v1660 = vpop.xlane.xlu0 %1659
        %v1661 = vmul.f32 %v1660, %v1654
        %v1662 = vadd.f32 %v1661, 1e-05
        %v1663 = vrsqrt.pop %v1662
        %v1664 = vmul.f32 %v1663, %v1662
        %v1665 = vmul.f32 %v1664, %v1663
        %v1666 = vmul.f32 0.5, %v1665
        %v1667 = vsub.f32 1.5, %v1666
        %v1668 = vmul.f32 %v1663, %v1667
        %vm1669 = vweird.f32 %v1662
        %vm1670 = vweird.f32 %v1663
        %vm1671 = vmor %vm1669, %vm1670
        %v1672 = vsel %vm1671, %v1663, %v1668
        %v1673 = vmul.f32 %v1656, %v1672
        %v1674 = vld [vmem:[%s884] sm:$0x1]
        %v1676 = vperm.slane %v1674, 0
        %v1678 = vmul.f32 %v1673, %v1676
        %v1679 = vld [vmem:[%s887] sm:$0x1]
        %v1681 = vperm.slane %v1679, 0
        %v1683 = vadd.f32 %v1678, %v1681
        %1685 = vset.pattern.permute.xlu0 0
        %1686 = vperm.xlu0 %1685, %v920
        %v1687 = vpop.permute.xlu0 %1686
        %v1689 = vmul.f32 %v1683, %v1687
        %v1690 = vpack.c.bf16 %v1689, %v1689
        %v1691 = vld [vmem:[%s892] sm:$0xf]
        %v1692 = vld [vmem:[%s892 + $0x4] sm:$0xf]
        %v1693 = vld [vmem:[%s892 + $0x8] sm:$0xf]
        %v1694 = vld [vmem:[%s892 + $0xc] sm:$0xf]
        %v1695 = vld [vmem:[%s895] sm:$0x1]
        %v1697 = vperm.slane %v1695, 0
        %v1703 = vunpack.c.l.b16 %v1691
        %v1704 = vunpack.c.l.b16 %v1692
        %v1705 = vunpack.c.l.b16 %v1693
        %v1706 = vunpack.c.l.b16 %v1694
        %v1707 = vpack.c.b16 %v1704, %v1703
        %v1708 = vpack.c.b16 %v1706, %v1705
        %v1712 = vsel %vm966, %v1690, 0
        %1714 = vmatpush.bf16.msra.mxu0 0
        %1715 = vmatpush.bf16.msra.mxu0 0
        %1716 = vmatpush.bf16.msra.mxu0 0
        %1717 = vmatpush.bf16.msra.mxu0 0
        %1718 = vmatpush.bf16.msra.mxu0 0
        %1719 = vmatpush.bf16.msra.mxu0 0
        %1720 = vmatpush.bf16.msra.mxu0 %v1708
        %1721 = vmatpush.bf16.msra.mxu0 %v1707
        %1722 = vmatmul.bf16.gmra.mxu0 %v1712
        %v1723 = vpop.f32.mrf.mxu0
        %v1724 = vadd.f32 %v1697, %v1723
        %v1725 = vpop.f32.mrf.mxu0
        %1726 = vdwg.mxu0
        %v1727 = vmax.f32 %v1724, 0.0
        %v1728 = vpack.c.bf16 %v1727, %v1727
        %v1729 = vld [vmem:[%s900] sm:$0xf]
        %v1730 = vld [vmem:[%s900 + $0x4] sm:$0xf]
        %v1731 = vld [vmem:[%s900 + $0x8] sm:$0xf]
        %v1732 = vld [vmem:[%s900 + $0xc] sm:$0xf]
        %v1733 = vld [vmem:[%s900 + $0x10] sm:$0xf]
        %v1734 = vld [vmem:[%s900 + $0x14] sm:$0xf]
        %v1735 = vld [vmem:[%s900 + $0x18] sm:$0xf]
        %v1736 = vld [vmem:[%s900 + $0x1c] sm:$0xf]
        %v1737 = vld [vmem:[%s903] sm:$0x1]
        %v1739 = vperm.slane %v1737, 0
        %v1749 = vunpack.c.l.b16 %v1729
        %v1750 = vunpack.c.l.b16 %v1730
        %v1751 = vunpack.c.l.b16 %v1731
        %v1752 = vunpack.c.l.b16 %v1732
        %v1753 = vunpack.c.l.b16 %v1733
        %v1754 = vunpack.c.l.b16 %v1734
        %v1755 = vunpack.c.l.b16 %v1735
        %v1756 = vunpack.c.l.b16 %v1736
        %v1757 = vpack.c.b16 %v1750, %v1749
        %v1758 = vpack.c.b16 %v1752, %v1751
        %v1759 = vpack.c.b16 %v1754, %v1753
        %v1760 = vpack.c.b16 %v1756, %v1755
        %vm1765 = vcmask 523264
        %v1767 = vsel %vm1765, %v1728, 0
        %1769 = vmatpush.bf16.msra.mxu0 0
        %1770 = vmatpush.bf16.msra.mxu0 0
        %1771 = vmatpush.bf16.msra.mxu0 0
        %1772 = vmatpush.bf16.msra.mxu0 0
        %1773 = vmatpush.bf16.msra.mxu0 %v1760
        %1774 = vmatpush.bf16.msra.mxu0 %v1759
        %1775 = vmatpush.bf16.msra.mxu0 %v1758
        %1776 = vmatpush.bf16.msra.mxu0 %v1757
        %1777 = vmatmul.bf16.gmra.mxu0 %v1767
        %v1778 = vpop.f32.mrf.mxu0
        %v1779 = vadd.f32 %v1739, %v1778
        %v1780 = vpop.f32.mrf.mxu0
        %1781 = vdwg.mxu0
        %v1782 = vadd.f32 %v1779, %v1689
        %v1783 = vsel %vm966, %v1782, 0.0
        %1784 = vadd.xlane.f32.xlu0 %v1783
        %v1785 = vpop.xlane.xlu0 %1784
        %v1786 = vmul.f32 %v1785, %v1654
        %v1787 = vsub.f32 %v1782, %v1786
        %v1788 = vmul.f32 %v1787, %v1787
        %v1789 = vsel %vm966, %v1788, 0.0
        %1790 = vadd.xlane.f32.xlu0 %v1789
        %v1791 = vpop.xlane.xlu0 %1790
        %v1792 = vmul.f32 %v1791, %v1654
        %v1793 = vadd.f32 %v1792, 1e-05
        %v1794 = vrsqrt.pop %v1793
        %v1795 = vmul.f32 %v1794, %v1793
        %v1796 = vmul.f32 %v1795, %v1794
        %v1797 = vmul.f32 0.5, %v1796
        %v1798 = vsub.f32 1.5, %v1797
        %v1799 = vmul.f32 %v1794, %v1798
        %vm1800 = vweird.f32 %v1793
        %vm1801 = vweird.f32 %v1794
        %vm1802 = vmor %vm1800, %vm1801
        %v1803 = vsel %vm1802, %v1794, %v1799
        %v1804 = vmul.f32 %v1787, %v1803
        %v1805 = vld [vmem:[%s906] sm:$0x1]
        %v1807 = vperm.slane %v1805, 0
        %v1809 = vmul.f32 %v1804, %v1807
        %v1810 = vld [vmem:[%s909] sm:$0x1]
        %v1812 = vperm.slane %v1810, 0
        %v1814 = vadd.f32 %v1809, %v1812
        %v1815 = vmul.f32 %v1814, %v1687
        %1816 = vst.msk [vmem:[#allocation2] sm:$0xff] %vm966, %v1815
        %1817 = vst.msk [vmem:[%s835] sm:$0xff] %vm966, %v1815
        %s1818 = sand.u32 %s547, 1
        %s1819 = scalar_lea.sflag [#allocation4], %s1818
        %s1820 = sand.u32 %s547, 1
        %s1821 = smul.addr %s1820, 8
        %s1822 = scalar_lea.vmem [#allocation3], %s1821
        // Predicated region
        $region101: #{tpu_custom_call.1} parent=95 // pred_check
          %p1823 = pneg %p557
        $region102: #{tpu_custom_call.1} parent=95 // pred_check_branch
          %1825 = sbr.rel (%p1823) target = $region104
        $region103: #{tpu_custom_call.1} parent=95 // pred_region
          %1827 = vsyncadd %s1819, 0
          %s1828 = smul.addr %s37, 8
          %s1829 = scalar_lea.hbm %s19, %s1828
          %s1831 = sshll.u32 %s1822, 4
          %s1832 = int_to_ptr.vmem [resolvable:$true] %s1831
          %s1833 = sshll.u32 %s1829, 4
          %s1834 = int_to_ptr.hbm [resolvable:$true] %s1833
          %1836 = dma.vmem_to_hbm [thread:$0]  %s1832, 128, %s1834, %s1819
        $region104: #{tpu_custom_call.1} parent=95 // pred_fallthru
          _
      $region96: #{tpu_custom_call.1} parent=5 // pred_fallthru
        _
      %p1837 = scmp.le.s32.totalorder 2, %s28
      // Predicated region
      $region105: #{tpu_custom_call.1} parent=5 // pred_check
        %p1838 = pneg %p1837
      $region106: #{tpu_custom_call.1} parent=5 // pred_check_branch
        %1840 = sbr.rel (%p1838) target = $region108
      $region107: #{tpu_custom_call.1} parent=5 // pred_region
        %s1841 = ssub.s32 %s28, 2
        // Predicated region
        $region109: #{tpu_custom_call.1} parent=107 // pred_check
          %p1842 = pneg %p563
        $region110: #{tpu_custom_call.1} parent=107 // pred_check_branch
          %1844 = sbr.rel (%p1842) target = $region112
        $region111: #{tpu_custom_call.1} parent=107 // pred_region
          %s1845 = sand.u32 %s548, 1
          %s1846 = scalar_lea.sflag [#allocation4], %s1845
          %s1847 = sand.u32 %s548, 1
          %s1848 = smul.addr %s1847, 8
          %s1849 = scalar_lea.vmem [#allocation3], %s1848
          %1851 = dma.done %s1846, 128
        $region112: #{tpu_custom_call.1} parent=107 // pred_fallthru
          _
      $region108: #{tpu_custom_call.1} parent=5 // pred_fallthru
        _
    $region6: #{tpu_custom_call.1} parent=1 // loop_footer
      %s32 = sadd.s32 1, %s28
    $region7: #{tpu_custom_call.1} parent=1 // loop_footer_branch
      %27 = sbr.rel target = $region3
    $region8: #{tpu_custom_call.1} parent=1 // loop_exit
      _
    %1852 = vsyncpa [#allocation4], 1
    %s1853 = scalar_lea.sflag [#allocation4], 1
    %1854 = vsyncpa %s1853, 1

</llo_original>
